<compile_context>
chip_gen: v7x
topology: tpu7x:2x2x1
jax: 0.10.0
libtpu: 0.0.40
codegen_flags: <defaults>
</compile_context>

<pallas_src>
import jax
import jax.numpy as jnp
from jax import lax
from jax.experimental import pallas as pl
from jax.experimental.pallas import tpu as pltpu

IMG_DIM = 2048     # image Projection: nn.Linear(2048, 256)
TXT_DIM = 768      # text Projection:  nn.Linear(768, 256)
PROJ_DIM = 256     # shared embedding dim
TEMPERATURE = 0.5
BATCH = 32         # multiple of 16 -> full bf16 sublane packing, amortizes weight DMA


def clip_loss_kernel(img_ref, txt_ref, wi_ref, bi_ref, wt_ref, bt_ref, out_ref):
    """Projections (bf16 MXU, f32 acc), L2-normalize, logits, symmetric CE."""
    # --- In-kernel cast of the f32 encoder features to bf16 (VPU, VMEM-resident).
    #     Weights arrive already bf16 (persistent parameter dtype), biases f32.
    img = img_ref[...].astype(jnp.bfloat16)
    txt = txt_ref[...].astype(jnp.bfloat16)

    # --- Projection heads: bf16 x bf16 on the MXU, f32 accumulation ---
    img_emb = jnp.dot(img, wi_ref[...],
                      preferred_element_type=jnp.float32) + bi_ref[...]   # [B, 256] f32
    txt_emb = jnp.dot(txt, wt_ref[...],
                      preferred_element_type=jnp.float32) + bt_ref[...]   # [B, 256] f32

    # --- F.normalize(x, dim=-1): x * rsqrt(max(sum(x^2), eps^2)) (== x / max(||x||, eps))
    #     rsqrt runs on the EUP slot; no VALU divides, one fewer sqrt.
    eps2 = 1e-24  # (1e-12)^2, representable in f32
    img_emb = img_emb * lax.rsqrt(
        jnp.maximum(jnp.sum(img_emb * img_emb, axis=-1, keepdims=True), eps2))
    txt_emb = txt_emb * lax.rsqrt(
        jnp.maximum(jnp.sum(txt_emb * txt_emb, axis=-1, keepdims=True), eps2))

    # --- logits = img_emb @ txt_emb.T / T ---
    # Contract the last dims directly (rhs-transposed matmul) so Mosaic does not
    # materialize an XLU transpose of the [B, 256] txt_emb.
    logits = lax.dot_general(
        img_emb, txt_emb, (((1,), (1,)), ((), ())),
        preferred_element_type=jnp.float32) * (1.0 / TEMPERATURE)         # [B, B]
    b = logits.shape[0]

    # Diagonal logits[i, i] extracted once via an iota mask (labels = arange(B)
    # for BOTH cross-entropy directions, so a single masked reduce suffices).
    row_id = lax.broadcasted_iota(jnp.int32, (b, b), 0)
    col_id = lax.broadcasted_iota(jnp.int32, (b, b), 1)
    eye = (row_id == col_id).astype(jnp.float32)
    mean_diag = jnp.sum(logits * eye) * (1.0 / b)

    # text loss: logsumexp over axis=1 (per image row); image loss: over axis=0.
    m_row = jnp.max(logits, axis=1, keepdims=True)
    lse_row = m_row + jnp.log(jnp.sum(jnp.exp(logits - m_row), axis=1, keepdims=True))
    m_col = jnp.max(logits, axis=0, keepdims=True)
    lse_col = m_col + jnp.log(jnp.sum(jnp.exp(logits - m_col), axis=0, keepdims=True))

    # 0.5 * (mean(lse_col - diag) + mean(lse_row - diag))
    loss = 0.5 * (jnp.mean(lse_row) + jnp.mean(lse_col)) - mean_diag
    out_ref[0, 0] = loss    # scalar sink: SMEM, no lane-sparse VMEM store


def clip_loss(image_features, text_features, w_img, b_img, w_txt, b_txt):
    """image_features/text_features: f32 [B, D_in]; w_*: bf16 [D_in, 256]; b_*: f32 [1, 256].
    No dtype converts at this call boundary (would run as separate XLA fusions)."""
    vmem = pl.BlockSpec(memory_space=pltpu.MemorySpace.VMEM)
    smem = pl.BlockSpec(memory_space=pltpu.MemorySpace.SMEM)

    B = image_features.shape[0]
    cost = pl.CostEstimate(
        # projection matmuls + logits matmul
        flops=2 * B * PROJ_DIM * (IMG_DIM + TXT_DIM) + 2 * B * B * PROJ_DIM,
        transcendentals=2 * B * B + 4 * B,                       # exp + log + rsqrt
        bytes_accessed=(2 * PROJ_DIM * (IMG_DIM + TXT_DIM)       # bf16 weights
                        + 4 * B * (IMG_DIM + TXT_DIM)            # f32 features
                        + 4 * 2 * PROJ_DIM                       # f32 biases
                        + 4),                                    # f32 scalar out
    )

    return pl.pallas_call(
        clip_loss_kernel,
        out_shape=jax.ShapeDtypeStruct((1, 1), jnp.float32),
        in_specs=[vmem] * 6,
        out_specs=smem,
        cost_estimate=cost,
    )(image_features, text_features, w_img, b_img, w_txt, b_txt)


def clip_loss_ref(image_features, text_features, w_img, b_img, w_txt, b_txt):
    """Pure-JAX reference mirroring the PyTorch forward and the kernel's dtype
    policy (bf16 matmul operands, f32 accumulation / math)."""
    img = image_features.astype(jnp.bfloat16).astype(jnp.float32)   # in-kernel cast
    txt = text_features.astype(jnp.bfloat16).astype(jnp.float32)
    wi = w_img.astype(jnp.float32)                                  # weights already bf16
    wt = w_txt.astype(jnp.float32)

    img_emb = img @ wi + b_img
    txt_emb = txt @ wt + b_txt
    img_emb = img_emb / jnp.maximum(jnp.linalg.norm(img_emb, axis=-1, keepdims=True), 1e-12)
    txt_emb = txt_emb / jnp.maximum(jnp.linalg.norm(txt_emb, axis=-1, keepdims=True), 1e-12)
    logits = img_emb @ txt_emb.T / TEMPERATURE
    labels = jnp.arange(logits.shape[0])
    diag = logits[labels, labels]
    text_loss = jnp.mean(jax.nn.logsumexp(logits, axis=1) - diag)
    image_loss = jnp.mean(jax.nn.logsumexp(logits, axis=0) - diag)
    return 0.5 * (image_loss + text_loss)


if __name__ == "__main__":
    key = jax.random.PRNGKey(0)
    k1, k2, k3, k4, k5, k6 = jax.random.split(key, 6)

    # Encoder outputs (synthetic, deterministic) — native f32, cast in-kernel.
    image_features = jax.random.normal(k1, (BATCH, IMG_DIM), jnp.float32)
    text_features = jax.random.normal(k2, (BATCH, TXT_DIM), jnp.float32)

    # Projection parameters (nn.Linear(2048,256) / nn.Linear(768,256)), stored
    # as [in, out] so the kernel computes x @ W + b (== x @ W_torch.T + b).
    # Weights are created once in bf16 (persistent parameter dtype) so the
    # pallas_call receives them with no convert HLO in front of it.
    w_img = (jax.random.normal(k3, (IMG_DIM, PROJ_DIM), jnp.float32)
             * (1.0 / IMG_DIM ** 0.5)).astype(jnp.bfloat16)
    b_img = jax.random.normal(k4, (1, PROJ_DIM), jnp.float32) * 0.01
    w_txt = (jax.random.normal(k5, (TXT_DIM, PROJ_DIM), jnp.float32)
             * (1.0 / TXT_DIM ** 0.5)).astype(jnp.bfloat16)
    b_txt = jax.random.normal(k6, (1, PROJ_DIM), jnp.float32) * 0.01

    loss = clip_loss(image_features, text_features, w_img, b_img, w_txt, b_txt)
    loss = jax.block_until_ready(loss)

    ref = clip_loss_ref(image_features, text_features, w_img, b_img, w_txt, b_txt)
    assert jnp.allclose(loss[0, 0], ref, atol=1e-2, rtol=1e-2), (loss, ref)

    print("KERNEL_OK")
</pallas_src>

<mosaic_0001>
module attributes {stable_mosaic.version = 11 : i64} {
  func.func @clip_loss_kernel(%arg0: memref<32x2048xf32, #tpu.memory_space<vmem>>, %arg1: memref<32x768xf32, #tpu.memory_space<vmem>>, %arg2: memref<2048x256xbf16, #tpu.memory_space<vmem>>, %arg3: memref<1x256xf32, #tpu.memory_space<vmem>>, %arg4: memref<768x256xbf16, #tpu.memory_space<vmem>>, %arg5: memref<1x256xf32, #tpu.memory_space<vmem>>, %arg6: memref<1x1xf32, #tpu.memory_space<smem>>) attributes {dimension_semantics = [], scalar_prefetch = 0 : i64, scratch_operands = 0 : i64, tpu.core_type = #tpu.core_type<tc>} {
    %c0 = arith.constant 0 : index
    %c0_0 = arith.constant 0 : index
    %0 = vector.load %arg0[%c0, %c0_0] : memref<32x2048xf32, #tpu.memory_space<vmem>>, vector<32x2048xf32>
    %1 = arith.truncf %0 : vector<32x2048xf32> to vector<32x2048xbf16>
    %c0_1 = arith.constant 0 : index
    %c0_2 = arith.constant 0 : index
    %2 = vector.load %arg1[%c0_1, %c0_2] : memref<32x768xf32, #tpu.memory_space<vmem>>, vector<32x768xf32>
    %3 = arith.truncf %2 : vector<32x768xf32> to vector<32x768xbf16>
    %c0_3 = arith.constant 0 : index
    %c0_4 = arith.constant 0 : index
    %4 = vector.load %arg2[%c0_3, %c0_4] : memref<2048x256xbf16, #tpu.memory_space<vmem>>, vector<2048x256xbf16>
    %cst = arith.constant dense<0.000000e+00> : vector<32x256xf32>
    %5 = tpu.matmul %1, %4, %cst {dimension_numbers = #tpu.dot_dimension_numbers<[1], [0], [0], [1], [0, 0, 1, 1], [], []>} : vector<32x2048xbf16>, vector<2048x256xbf16>, vector<32x256xf32> -> vector<32x256xf32>
    %c0_5 = arith.constant 0 : index
    %c0_6 = arith.constant 0 : index
    %6 = vector.load %arg3[%c0_5, %c0_6] : memref<1x256xf32, #tpu.memory_space<vmem>>, vector<1x256xf32>
    %7 = vector.broadcast %6 : vector<1x256xf32> to vector<32x256xf32>
    %8 = arith.addf %5, %7 : vector<32x256xf32>
    %c0_7 = arith.constant 0 : index
    %c0_8 = arith.constant 0 : index
    %9 = vector.load %arg4[%c0_7, %c0_8] : memref<768x256xbf16, #tpu.memory_space<vmem>>, vector<768x256xbf16>
    %cst_9 = arith.constant dense<0.000000e+00> : vector<32x256xf32>
    %10 = tpu.matmul %3, %9, %cst_9 {dimension_numbers = #tpu.dot_dimension_numbers<[1], [0], [0], [1], [0, 0, 1, 1], [], []>} : vector<32x768xbf16>, vector<768x256xbf16>, vector<32x256xf32> -> vector<32x256xf32>
    %c0_10 = arith.constant 0 : index
    %c0_11 = arith.constant 0 : index
    %11 = vector.load %arg5[%c0_10, %c0_11] : memref<1x256xf32, #tpu.memory_space<vmem>>, vector<1x256xf32>
    %12 = vector.broadcast %11 : vector<1x256xf32> to vector<32x256xf32>
    %13 = arith.addf %10, %12 : vector<32x256xf32>
    %14 = arith.mulf %8, %8 : vector<32x256xf32>
    %cst_12 = arith.constant dense<0.000000e+00> : vector<32xf32>
    %15 = vector.multi_reduction <add>, %14, %cst_12 [1] : vector<32x256xf32> to vector<32xf32>
    %16 = vector.shape_cast %15 : vector<32xf32> to vector<32x1xf32>
    %cst_13 = arith.constant 1.000000e-24 : f32
    %17 = vector.broadcast %cst_13 : f32 to vector<32x1xf32>
    %18 = arith.maximumf %16, %17 : vector<32x1xf32>
    %19 = math.rsqrt %18 : vector<32x1xf32>
    %20 = vector.broadcast %19 : vector<32x1xf32> to vector<32x256xf32>
    %21 = arith.mulf %8, %20 : vector<32x256xf32>
    %22 = arith.mulf %13, %13 : vector<32x256xf32>
    %cst_14 = arith.constant dense<0.000000e+00> : vector<32xf32>
    %23 = vector.multi_reduction <add>, %22, %cst_14 [1] : vector<32x256xf32> to vector<32xf32>
    %24 = vector.shape_cast %23 : vector<32xf32> to vector<32x1xf32>
    %cst_15 = arith.constant 1.000000e-24 : f32
    %25 = vector.broadcast %cst_15 : f32 to vector<32x1xf32>
    %26 = arith.maximumf %24, %25 : vector<32x1xf32>
    %27 = math.rsqrt %26 : vector<32x1xf32>
    %28 = vector.broadcast %27 : vector<32x1xf32> to vector<32x256xf32>
    %29 = arith.mulf %13, %28 : vector<32x256xf32>
    %cst_16 = arith.constant dense<0.000000e+00> : vector<32x32xf32>
    %30 = tpu.matmul %21, %29, %cst_16 {dimension_numbers = #tpu.dot_dimension_numbers<[1], [1], [0], [0], [0, 0, 1, 0], [], []>} : vector<32x256xf32>, vector<32x256xf32>, vector<32x32xf32> -> vector<32x32xf32>
    %cst_17 = arith.constant 2.000000e+00 : f32
    %31 = vector.broadcast %cst_17 : f32 to vector<32x32xf32>
    %32 = arith.mulf %30, %31 : vector<32x32xf32>
    %33 = tpu.iota {dimensions = array<i32: 0>} : vector<32x32xi32>
    %34 = tpu.iota {dimensions = array<i32: 1>} : vector<32x32xi32>
    %35 = arith.cmpi eq, %33, %34 : vector<32x32xi32>
    %36 = arith.extui %35 : vector<32x32xi1> to vector<32x32xi32>
    %37 = arith.sitofp %36 : vector<32x32xi32> to vector<32x32xf32>
    %38 = arith.mulf %32, %37 : vector<32x32xf32>
    %39 = vector.shape_cast %38 : vector<32x32xf32> to vector<1x32x32xf32>
    %cst_18 = arith.constant dense<0.000000e+00> : vector<1xf32>
    %40 = vector.multi_reduction <add>, %39, %cst_18 [1, 2] : vector<1x32x32xf32> to vector<1xf32>
    %41 = vector.shape_cast %40 : vector<1xf32> to vector<1x1x1xf32>
    %42 = vector.extract %41[0, 0, 0] : f32 from vector<1x1x1xf32>
    %cst_19 = arith.constant 3.125000e-02 : f32
    %43 = arith.mulf %42, %cst_19 : f32
    %cst_20 = arith.constant dense<0xFF800000> : vector<32xf32>
    %44 = vector.multi_reduction <maximumf>, %32, %cst_20 [1] : vector<32x32xf32> to vector<32xf32>
    %45 = vector.shape_cast %44 : vector<32xf32> to vector<32x1xf32>
    %46 = vector.broadcast %45 : vector<32x1xf32> to vector<32x32xf32>
    %47 = arith.subf %32, %46 : vector<32x32xf32>
    %48 = math.exp %47 : vector<32x32xf32>
    %cst_21 = arith.constant dense<0.000000e+00> : vector<32xf32>
    %49 = vector.multi_reduction <add>, %48, %cst_21 [1] : vector<32x32xf32> to vector<32xf32>
    %50 = vector.shape_cast %49 : vector<32xf32> to vector<32x1xf32>
    %51 = math.log %50 : vector<32x1xf32>
    %52 = arith.addf %45, %51 : vector<32x1xf32>
    %cst_22 = arith.constant dense<0xFF800000> : vector<32xf32>
    %53 = vector.multi_reduction <maximumf>, %32, %cst_22 [0] : vector<32x32xf32> to vector<32xf32>
    %54 = vector.shape_cast %53 : vector<32xf32> to vector<1x32xf32>
    %55 = vector.broadcast %54 : vector<1x32xf32> to vector<32x32xf32>
    %56 = arith.subf %32, %55 : vector<32x32xf32>
    %57 = math.exp %56 : vector<32x32xf32>
    %cst_23 = arith.constant dense<0.000000e+00> : vector<32xf32>
    %58 = vector.multi_reduction <add>, %57, %cst_23 [0] : vector<32x32xf32> to vector<32xf32>
    %59 = vector.shape_cast %58 : vector<32xf32> to vector<1x32xf32>
    %60 = math.log %59 : vector<1x32xf32>
    %61 = arith.addf %54, %60 : vector<1x32xf32>
    %62 = vector.shape_cast %52 : vector<32x1xf32> to vector<1x32x1xf32>
    %cst_24 = arith.constant dense<0.000000e+00> : vector<1xf32>
    %63 = vector.multi_reduction <add>, %62, %cst_24 [1, 2] : vector<1x32x1xf32> to vector<1xf32>
    %64 = vector.shape_cast %63 : vector<1xf32> to vector<1x1x1xf32>
    %65 = vector.extract %64[0, 0, 0] : f32 from vector<1x1x1xf32>
    %cst_25 = arith.constant 3.200000e+01 : f32
    %66 = arith.divf %65, %cst_25 : f32
    %67 = vector.shape_cast %61 : vector<1x32xf32> to vector<1x1x32xf32>
    %cst_26 = arith.constant dense<0.000000e+00> : vector<1xf32>
    %68 = vector.multi_reduction <add>, %67, %cst_26 [1, 2] : vector<1x1x32xf32> to vector<1xf32>
    %69 = vector.shape_cast %68 : vector<1xf32> to vector<1x1x1xf32>
    %70 = vector.extract %69[0, 0, 0] : f32 from vector<1x1x1xf32>
    %cst_27 = arith.constant 3.200000e+01 : f32
    %71 = arith.divf %70, %cst_27 : f32
    %72 = arith.addf %66, %71 : f32
    %cst_28 = arith.constant 5.000000e-01 : f32
    %73 = arith.mulf %cst_28, %72 : f32
    %74 = arith.subf %73, %43 : f32
    %c0_29 = arith.constant 0 : index
    %c0_30 = arith.constant 0 : index
    %75 = memref.load %arg6[%c0_29, %c0_30] : memref<1x1xf32, #tpu.memory_space<smem>>
    memref.store %74, %arg6[%c0_29, %c0_30] : memref<1x1xf32, #tpu.memory_space<smem>>
    return
  }
}

</mosaic_0001>

<llo_original>
// kernel: tpu_custom_call.1
$region0: #{tpu_custom_call.1}
  #allocation0 [shape = 'u32[]', space=smem, size = 0x4, offset = 0x4, fixed_abs, tag = 'smem constant byte address 0x4 - core index']
  #allocation1 [shape = 'u32[144,128]{1,0:T(1,128)}', space=vmem, size = 0x12000, scoped, tag = 'internal scratch']
  %s0 = inlined_call_operand.hbm [shape: f32[32,2048], index: 0, kind: input, shape index: {}]
  %s1 = inlined_call_operand.hbm [shape: f32[32,768], index: 1, kind: input, shape index: {}]
  %s2 = inlined_call_operand.hbm [shape: bf16[2048,256], index: 2, kind: input, shape index: {}]
  %s3 = inlined_call_operand.vmem [shape: f32[1,256], index: 3, kind: input, shape index: {}]
  %s4 = inlined_call_operand.hbm [shape: bf16[768,256], index: 4, kind: input, shape index: {}]
  %s5 = inlined_call_operand.vmem [shape: f32[1,256], index: 5, kind: input, shape index: {}]
  %s6 = inlined_call_operand.hbm [shape: f32[1,1], index: 6, kind: output, shape index: {}]
  %s7 = sld [smem:[#allocation0]]
  $region50: #{tpu_custom_call.1} parent=0
    _
  %s9 = ssub.s32 1, %s7
  %s10 = scalar_select 0, %s9, %s7
  $region1: #{tpu_custom_call.1} parent=0
    #allocation2 [shape = 'u8[262144]{0}', space=vmem, size = 0x40000, scoped, tag = 'input window, operand 0, single buffered']
    #allocation3 [shape = 's32[1]{0}', space=sflag, size = 0x4, scoped, tag = 'scoped memory for tpu_custom_call.1']
    #allocation4 [shape = 's32[1]{0}', space=sflag, size = 0x4, scoped, tag = 'scoped memory for tpu_custom_call.1']
    #allocation5 [shape = 'u8[98304]{0}', space=vmem, size = 0x18000, scoped, tag = 'input window, operand 1, single buffered']
    #allocation6 [shape = 's32[1]{0}', space=sflag, size = 0x4, scoped, tag = 'scoped memory for tpu_custom_call.1']
    #allocation7 [shape = 'u8[1048576]{0}', space=vmem, size = 0x100000, scoped, tag = 'input window, operand 2, single buffered']
    #allocation8 [shape = 'u8[393216]{0}', space=vmem, size = 0x60000, scoped, tag = 'input window, operand 4, single buffered']
    #allocation9 [shape = 's32[1]{0}', space=sflag, size = 0x4, scoped, tag = 'scoped memory for tpu_custom_call.1']
    #allocation10 [shape = 'u8[512]{0}', space=smem, size = 0x200, scoped, tag = 'output window, operand 0, single buffered']
    %11 = vsyncpa [#allocation3], 0
    %12 = vsyncpa [#allocation6], 0
    %13 = vsyncpa [#allocation9], 0
    %14 = vsyncpa [#allocation4], 0
    // Predicated region
    $region2: #{tpu_custom_call.1} parent=1 // pred_check
      _
    $region3: #{tpu_custom_call.1} parent=1 // pred_check_branch
      %16 = sbr.rel (0) target = $region5
    $region4: #{tpu_custom_call.1} parent=1 // pred_region
      %s18 = ssub.s32 8192, 8192
      %19 = vsyncadd [#allocation3], %s18
      %s20 = sshll.u32 [#allocation2], 4
      %s21 = int_to_ptr.vmem [resolvable:$true] %s20
      %26 = dma.hbm_to_vmem [thread:$0]  %s0, 8192, %s21, [#allocation3], 2048, 2048, 128
    $region5: #{tpu_custom_call.1} parent=1 // pred_fallthru
      _
    // Predicated region
    $region6: #{tpu_custom_call.1} parent=1 // pred_check
      _
    $region7: #{tpu_custom_call.1} parent=1 // pred_check_branch
      %28 = sbr.rel (0) target = $region9
    $region8: #{tpu_custom_call.1} parent=1 // pred_region
      %s30 = ssub.s32 3072, 3072
      %31 = vsyncadd [#allocation6], %s30
      %s32 = sshll.u32 [#allocation5], 4
      %s33 = int_to_ptr.vmem [resolvable:$true] %s32
      %38 = dma.hbm_to_vmem [thread:$0]  %s1, 3072, %s33, [#allocation6], 768, 768, 48
    $region9: #{tpu_custom_call.1} parent=1 // pred_fallthru
      _
    // Predicated region
    $region10: #{tpu_custom_call.1} parent=1 // pred_check
      _
    $region11: #{tpu_custom_call.1} parent=1 // pred_check_branch
      %40 = sbr.rel (0) target = $region13
    $region12: #{tpu_custom_call.1} parent=1 // pred_region
      %s42 = ssub.s32 32768, 32768
      %43 = vsyncadd [#allocation6], %s42
      %s44 = sshll.u32 [#allocation7], 4
      %s45 = int_to_ptr.vmem [resolvable:$true] %s44
      %50 = dma.hbm_to_vmem [thread:$0]  %s2, 32768, %s45, [#allocation6], 128, 128, 8
    $region13: #{tpu_custom_call.1} parent=1 // pred_fallthru
      _
    // Predicated region
    $region14: #{tpu_custom_call.1} parent=1 // pred_check
      _
    $region15: #{tpu_custom_call.1} parent=1 // pred_check_branch
      %52 = sbr.rel (0) target = $region17
    $region16: #{tpu_custom_call.1} parent=1 // pred_region
      _
    $region17: #{tpu_custom_call.1} parent=1 // pred_fallthru
      _
    // Predicated region
    $region18: #{tpu_custom_call.1} parent=1 // pred_check
      _
    $region19: #{tpu_custom_call.1} parent=1 // pred_check_branch
      %54 = sbr.rel (0) target = $region21
    $region20: #{tpu_custom_call.1} parent=1 // pred_region
      %s56 = ssub.s32 12288, 12288
      %57 = vsyncadd [#allocation9], %s56
      %s58 = sshll.u32 [#allocation8], 4
      %s59 = int_to_ptr.vmem [resolvable:$true] %s58
      %64 = dma.hbm_to_vmem [thread:$0]  %s4, 12288, %s59, [#allocation9], 128, 128, 8
    $region21: #{tpu_custom_call.1} parent=1 // pred_fallthru
      _
    // Predicated region
    $region22: #{tpu_custom_call.1} parent=1 // pred_check
      _
    $region23: #{tpu_custom_call.1} parent=1 // pred_check_branch
      %66 = sbr.rel (0) target = $region25
    $region24: #{tpu_custom_call.1} parent=1 // pred_region
      _
    $region25: #{tpu_custom_call.1} parent=1 // pred_fallthru
      _
    // Predicated region
    $region26: #{tpu_custom_call.1} parent=1 // pred_check
      _
    $region27: #{tpu_custom_call.1} parent=1 // pred_check_branch
      %68 = sbr.rel (0) target = $region29
    $region28: #{tpu_custom_call.1} parent=1 // pred_region
      %69 = dma.done [#allocation3], 8192
    $region29: #{tpu_custom_call.1} parent=1 // pred_fallthru
      _
    // Predicated region
    $region30: #{tpu_custom_call.1} parent=1 // pred_check
      _
    $region31: #{tpu_custom_call.1} parent=1 // pred_check_branch
      %71 = sbr.rel (0) target = $region33
    $region32: #{tpu_custom_call.1} parent=1 // pred_region
      %72 = dma.done [#allocation6], 3072
    $region33: #{tpu_custom_call.1} parent=1 // pred_fallthru
      _
    // Predicated region
    $region34: #{tpu_custom_call.1} parent=1 // pred_check
      _
    $region35: #{tpu_custom_call.1} parent=1 // pred_check_branch
      %74 = sbr.rel (0) target = $region37
    $region36: #{tpu_custom_call.1} parent=1 // pred_region
      %75 = dma.done [#allocation6], 32768
    $region37: #{tpu_custom_call.1} parent=1 // pred_fallthru
      _
    // Predicated region
    $region38: #{tpu_custom_call.1} parent=1 // pred_check
      _
    $region39: #{tpu_custom_call.1} parent=1 // pred_check_branch
      %77 = sbr.rel (0) target = $region41
    $region40: #{tpu_custom_call.1} parent=1 // pred_region
      %78 = dma.done [#allocation9], 12288
    $region41: #{tpu_custom_call.1} parent=1 // pred_fallthru
      _
    %v79 = vld [vmem:[#allocation2] sm:$0xff]
    %v80 = vld [vmem:[#allocation2 + $0x8] sm:$0xff]
    %v81 = vld [vmem:[#allocation2 + $0x10] sm:$0xff]
    %v82 = vld [vmem:[#allocation2 + $0x18] sm:$0xff]
    %v83 = vld [vmem:[#allocation2 + $0x20] sm:$0xff]
    %v84 = vld [vmem:[#allocation2 + $0x28] sm:$0xff]
    %v85 = vld [vmem:[#allocation2 + $0x30] sm:$0xff]
    %v86 = vld [vmem:[#allocation2 + $0x38] sm:$0xff]
    %v87 = vld [vmem:[#allocation2 + $0x40] sm:$0xff]
    %v88 = vld [vmem:[#allocation2 + $0x48] sm:$0xff]
    %v89 = vld [vmem:[#allocation2 + $0x50] sm:$0xff]
    %v90 = vld [vmem:[#allocation2 + $0x58] sm:$0xff]
    %v91 = vld [vmem:[#allocation2 + $0x60] sm:$0xff]
    %v92 = vld [vmem:[#allocation2 + $0x68] sm:$0xff]
    %v93 = vld [vmem:[#allocation2 + $0x70] sm:$0xff]
    %v94 = vld [vmem:[#allocation2 + $0x78] sm:$0xff]
    %v95 = vld [vmem:[#allocation2 + $0x80] sm:$0xff]
    %v96 = vld [vmem:[#allocation2 + $0x88] sm:$0xff]
    %v97 = vld [vmem:[#allocation2 + $0x90] sm:$0xff]
    %v98 = vld [vmem:[#allocation2 + $0x98] sm:$0xff]
    %v99 = vld [vmem:[#allocation2 + $0xa0] sm:$0xff]
    %v100 = vld [vmem:[#allocation2 + $0xa8] sm:$0xff]
    %v101 = vld [vmem:[#allocation2 + $0xb0] sm:$0xff]
    %v102 = vld [vmem:[#allocation2 + $0xb8] sm:$0xff]
    %v103 = vld [vmem:[#allocation2 + $0xc0] sm:$0xff]
    %v104 = vld [vmem:[#allocation2 + $0xc8] sm:$0xff]
    %v105 = vld [vmem:[#allocation2 + $0xd0] sm:$0xff]
    %v106 = vld [vmem:[#allocation2 + $0xd8] sm:$0xff]
    %v107 = vld [vmem:[#allocation2 + $0xe0] sm:$0xff]
    %v108 = vld [vmem:[#allocation2 + $0xe8] sm:$0xff]
    %v109 = vld [vmem:[#allocation2 + $0xf0] sm:$0xff]
    %v110 = vld [vmem:[#allocation2 + $0xf8] sm:$0xff]
    %v111 = vld [vmem:[#allocation2 + $0x100] sm:$0xff]
    %v112 = vld [vmem:[#allocation2 + $0x108] sm:$0xff]
    %v113 = vld [vmem:[#allocation2 + $0x110] sm:$0xff]
    %v114 = vld [vmem:[#allocation2 + $0x118] sm:$0xff]
    %v115 = vld [vmem:[#allocation2 + $0x120] sm:$0xff]
    %v116 = vld [vmem:[#allocation2 + $0x128] sm:$0xff]
    %v117 = vld [vmem:[#allocation2 + $0x130] sm:$0xff]
    %v118 = vld [vmem:[#allocation2 + $0x138] sm:$0xff]
    %v119 = vld [vmem:[#allocation2 + $0x140] sm:$0xff]
    %v120 = vld [vmem:[#allocation2 + $0x148] sm:$0xff]
    %v121 = vld [vmem:[#allocation2 + $0x150] sm:$0xff]
    %v122 = vld [vmem:[#allocation2 + $0x158] sm:$0xff]
    %v123 = vld [vmem:[#allocation2 + $0x160] sm:$0xff]
    %v124 = vld [vmem:[#allocation2 + $0x168] sm:$0xff]
    %v125 = vld [vmem:[#allocation2 + $0x170] sm:$0xff]
    %v126 = vld [vmem:[#allocation2 + $0x178] sm:$0xff]
    %v127 = vld [vmem:[#allocation2 + $0x180] sm:$0xff]
    %v128 = vld [vmem:[#allocation2 + $0x188] sm:$0xff]
    %v129 = vld [vmem:[#allocation2 + $0x190] sm:$0xff]
    %v130 = vld [vmem:[#allocation2 + $0x198] sm:$0xff]
    %v131 = vld [vmem:[#allocation2 + $0x1a0] sm:$0xff]
    %v132 = vld [vmem:[#allocation2 + $0x1a8] sm:$0xff]
    %v133 = vld [vmem:[#allocation2 + $0x1b0] sm:$0xff]
    %v134 = vld [vmem:[#allocation2 + $0x1b8] sm:$0xff]
    %v135 = vld [vmem:[#allocation2 + $0x1c0] sm:$0xff]
    %v136 = vld [vmem:[#allocation2 + $0x1c8] sm:$0xff]
    %v137 = vld [vmem:[#allocation2 + $0x1d0] sm:$0xff]
    %v138 = vld [vmem:[#allocation2 + $0x1d8] sm:$0xff]
    %v139 = vld [vmem:[#allocation2 + $0x1e0] sm:$0xff]
    %v140 = vld [vmem:[#allocation2 + $0x1e8] sm:$0xff]
    %v141 = vld [vmem:[#allocation2 + $0x1f0] sm:$0xff]
    %v142 = vld [vmem:[#allocation2 + $0x1f8] sm:$0xff]
    %v143 = vpack.c.bf16 %v95, %v79
    %v144 = vpack.c.bf16 %v96, %v80
    %v145 = vpack.c.bf16 %v97, %v81
    %v146 = vpack.c.bf16 %v98, %v82
    %v147 = vpack.c.bf16 %v99, %v83
    %v148 = vpack.c.bf16 %v100, %v84
    %v149 = vpack.c.bf16 %v101, %v85
    %v150 = vpack.c.bf16 %v102, %v86
    %v151 = vpack.c.bf16 %v103, %v87
    %v152 = vpack.c.bf16 %v104, %v88
    %v153 = vpack.c.bf16 %v105, %v89
    %v154 = vpack.c.bf16 %v106, %v90
    %v155 = vpack.c.bf16 %v107, %v91
    %v156 = vpack.c.bf16 %v108, %v92
    %v157 = vpack.c.bf16 %v109, %v93
    %v158 = vpack.c.bf16 %v110, %v94
    %v159 = vpack.c.bf16 %v127, %v111
    %v160 = vpack.c.bf16 %v128, %v112
    %v161 = vpack.c.bf16 %v129, %v113
    %v162 = vpack.c.bf16 %v130, %v114
    %v163 = vpack.c.bf16 %v131, %v115
    %v164 = vpack.c.bf16 %v132, %v116
    %v165 = vpack.c.bf16 %v133, %v117
    %v166 = vpack.c.bf16 %v134, %v118
    %v167 = vpack.c.bf16 %v135, %v119
    %v168 = vpack.c.bf16 %v136, %v120
    %v169 = vpack.c.bf16 %v137, %v121
    %v170 = vpack.c.bf16 %v138, %v122
    %v171 = vpack.c.bf16 %v139, %v123
    %v172 = vpack.c.bf16 %v140, %v124
    %v173 = vpack.c.bf16 %v141, %v125
    %v174 = vpack.c.bf16 %v142, %v126
    %v175 = vld [vmem:[#allocation5] sm:$0xff]
    %v176 = vld [vmem:[#allocation5 + $0x8] sm:$0xff]
    %v177 = vld [vmem:[#allocation5 + $0x10] sm:$0xff]
    %v178 = vld [vmem:[#allocation5 + $0x18] sm:$0xff]
    %v179 = vld [vmem:[#allocation5 + $0x20] sm:$0xff]
    %v180 = vld [vmem:[#allocation5 + $0x28] sm:$0xff]
    %v181 = vld [vmem:[#allocation5 + $0x30] sm:$0xff]
    %v182 = vld [vmem:[#allocation5 + $0x38] sm:$0xff]
    %v183 = vld [vmem:[#allocation5 + $0x40] sm:$0xff]
    %v184 = vld [vmem:[#allocation5 + $0x48] sm:$0xff]
    %v185 = vld [vmem:[#allocation5 + $0x50] sm:$0xff]
    %v186 = vld [vmem:[#allocation5 + $0x58] sm:$0xff]
    %v187 = vld [vmem:[#allocation5 + $0x60] sm:$0xff]
    %v188 = vld [vmem:[#allocation5 + $0x68] sm:$0xff]
    %v189 = vld [vmem:[#allocation5 + $0x70] sm:$0xff]
    %v190 = vld [vmem:[#allocation5 + $0x78] sm:$0xff]
    %v191 = vld [vmem:[#allocation5 + $0x80] sm:$0xff]
    %v192 = vld [vmem:[#allocation5 + $0x88] sm:$0xff]
    %v193 = vld [vmem:[#allocation5 + $0x90] sm:$0xff]
    %v194 = vld [vmem:[#allocation5 + $0x98] sm:$0xff]
    %v195 = vld [vmem:[#allocation5 + $0xa0] sm:$0xff]
    %v196 = vld [vmem:[#allocation5 + $0xa8] sm:$0xff]
    %v197 = vld [vmem:[#allocation5 + $0xb0] sm:$0xff]
    %v198 = vld [vmem:[#allocation5 + $0xb8] sm:$0xff]
    %v199 = vpack.c.bf16 %v181, %v175
    %v200 = vpack.c.bf16 %v182, %v176
    %v201 = vpack.c.bf16 %v183, %v177
    %v202 = vpack.c.bf16 %v184, %v178
    %v203 = vpack.c.bf16 %v185, %v179
    %v204 = vpack.c.bf16 %v186, %v180
    %v205 = vpack.c.bf16 %v193, %v187
    %v206 = vpack.c.bf16 %v194, %v188
    %v207 = vpack.c.bf16 %v195, %v189
    %v208 = vpack.c.bf16 %v196, %v190
    %v209 = vpack.c.bf16 %v197, %v191
    %v210 = vpack.c.bf16 %v198, %v192
    %v211 = vld [vmem:[#allocation7] sm:$0xff]
    %v212 = vld [vmem:[#allocation7 + $0x8] sm:$0xff]
    %v213 = vld [vmem:[#allocation7 + $0x10] sm:$0xff]
    %v214 = vld [vmem:[#allocation7 + $0x18] sm:$0xff]
    %v215 = vld [vmem:[#allocation7 + $0x20] sm:$0xff]
    %v216 = vld [vmem:[#allocation7 + $0x28] sm:$0xff]
    %v217 = vld [vmem:[#allocation7 + $0x30] sm:$0xff]
    %v218 = vld [vmem:[#allocation7 + $0x38] sm:$0xff]
    %v219 = vld [vmem:[#allocation7 + $0x40] sm:$0xff]
    %v220 = vld [vmem:[#allocation7 + $0x48] sm:$0xff]
    %v221 = vld [vmem:[#allocation7 + $0x50] sm:$0xff]
    %v222 = vld [vmem:[#allocation7 + $0x58] sm:$0xff]
    %v223 = vld [vmem:[#allocation7 + $0x60] sm:$0xff]
    %v224 = vld [vmem:[#allocation7 + $0x68] sm:$0xff]
    %v225 = vld [vmem:[#allocation7 + $0x70] sm:$0xff]
    %v226 = vld [vmem:[#allocation7 + $0x78] sm:$0xff]
    %v227 = vld [vmem:[#allocation7 + $0x80] sm:$0xff]
    %v228 = vld [vmem:[#allocation7 + $0x88] sm:$0xff]
    %v229 = vld [vmem:[#allocation7 + $0x90] sm:$0xff]
    %v230 = vld [vmem:[#allocation7 + $0x98] sm:$0xff]
    %v231 = vld [vmem:[#allocation7 + $0xa0] sm:$0xff]
    %v232 = vld [vmem:[#allocation7 + $0xa8] sm:$0xff]
    %v233 = vld [vmem:[#allocation7 + $0xb0] sm:$0xff]
    %v234 = vld [vmem:[#allocation7 + $0xb8] sm:$0xff]
    %v235 = vld [vmem:[#allocation7 + $0xc0] sm:$0xff]
    %v236 = vld [vmem:[#allocation7 + $0xc8] sm:$0xff]
    %v237 = vld [vmem:[#allocation7 + $0xd0] sm:$0xff]
    %v238 = vld [vmem:[#allocation7 + $0xd8] sm:$0xff]
    %v239 = vld [vmem:[#allocation7 + $0xe0] sm:$0xff]
    %v240 = vld [vmem:[#allocation7 + $0xe8] sm:$0xff]
    %v241 = vld [vmem:[#allocation7 + $0xf0] sm:$0xff]
    %v242 = vld [vmem:[#allocation7 + $0xf8] sm:$0xff]
    %v243 = vld [vmem:[#allocation7 + $0x100] sm:$0xff]
    %v244 = vld [vmem:[#allocation7 + $0x108] sm:$0xff]
    %v245 = vld [vmem:[#allocation7 + $0x110] sm:$0xff]
    %v246 = vld [vmem:[#allocation7 + $0x118] sm:$0xff]
    %v247 = vld [vmem:[#allocation7 + $0x120] sm:$0xff]
    %v248 = vld [vmem:[#allocation7 + $0x128] sm:$0xff]
    %v249 = vld [vmem:[#allocation7 + $0x130] sm:$0xff]
    %v250 = vld [vmem:[#allocation7 + $0x138] sm:$0xff]
    %v251 = vld [vmem:[#allocation7 + $0x140] sm:$0xff]
    %v252 = vld [vmem:[#allocation7 + $0x148] sm:$0xff]
    %v253 = vld [vmem:[#allocation7 + $0x150] sm:$0xff]
    %v254 = vld [vmem:[#allocation7 + $0x158] sm:$0xff]
    %v255 = vld [vmem:[#allocation7 + $0x160] sm:$0xff]
    %v256 = vld [vmem:[#allocation7 + $0x168] sm:$0xff]
    %v257 = vld [vmem:[#allocation7 + $0x170] sm:$0xff]
    %v258 = vld [vmem:[#allocation7 + $0x178] sm:$0xff]
    %v259 = vld [vmem:[#allocation7 + $0x180] sm:$0xff]
    %v260 = vld [vmem:[#allocation7 + $0x188] sm:$0xff]
    %v261 = vld [vmem:[#allocation7 + $0x190] sm:$0xff]
    %v262 = vld [vmem:[#allocation7 + $0x198] sm:$0xff]
    %v263 = vld [vmem:[#allocation7 + $0x1a0] sm:$0xff]
    %v264 = vld [vmem:[#allocation7 + $0x1a8] sm:$0xff]
    %v265 = vld [vmem:[#allocation7 + $0x1b0] sm:$0xff]
    %v266 = vld [vmem:[#allocation7 + $0x1b8] sm:$0xff]
    %v267 = vld [vmem:[#allocation7 + $0x1c0] sm:$0xff]
    %v268 = vld [vmem:[#allocation7 + $0x1c8] sm:$0xff]
    %v269 = vld [vmem:[#allocation7 + $0x1d0] sm:$0xff]
    %v270 = vld [vmem:[#allocation7 + $0x1d8] sm:$0xff]
    %v271 = vld [vmem:[#allocation7 + $0x1e0] sm:$0xff]
    %v272 = vld [vmem:[#allocation7 + $0x1e8] sm:$0xff]
    %v273 = vld [vmem:[#allocation7 + $0x1f0] sm:$0xff]
    %v274 = vld [vmem:[#allocation7 + $0x1f8] sm:$0xff]
    %v275 = vld [vmem:[#allocation7 + $0x200] sm:$0xff]
    %v276 = vld [vmem:[#allocation7 + $0x208] sm:$0xff]
    %v277 = vld [vmem:[#allocation7 + $0x210] sm:$0xff]
    %v278 = vld [vmem:[#allocation7 + $0x218] sm:$0xff]
    %v279 = vld [vmem:[#allocation7 + $0x220] sm:$0xff]
    %v280 = vld [vmem:[#allocation7 + $0x228] sm:$0xff]
    %v281 = vld [vmem:[#allocation7 + $0x230] sm:$0xff]
    %v282 = vld [vmem:[#allocation7 + $0x238] sm:$0xff]
    %v283 = vld [vmem:[#allocation7 + $0x240] sm:$0xff]
    %v284 = vld [vmem:[#allocation7 + $0x248] sm:$0xff]
    %v285 = vld [vmem:[#allocation7 + $0x250] sm:$0xff]
    %v286 = vld [vmem:[#allocation7 + $0x258] sm:$0xff]
    %v287 = vld [vmem:[#allocation7 + $0x260] sm:$0xff]
    %v288 = vld [vmem:[#allocation7 + $0x268] sm:$0xff]
    %v289 = vld [vmem:[#allocation7 + $0x270] sm:$0xff]
    %v290 = vld [vmem:[#allocation7 + $0x278] sm:$0xff]
    %v291 = vld [vmem:[#allocation7 + $0x280] sm:$0xff]
    %v292 = vld [vmem:[#allocation7 + $0x288] sm:$0xff]
    %v293 = vld [vmem:[#allocation7 + $0x290] sm:$0xff]
    %v294 = vld [vmem:[#allocation7 + $0x298] sm:$0xff]
    %v295 = vld [vmem:[#allocation7 + $0x2a0] sm:$0xff]
    %v296 = vld [vmem:[#allocation7 + $0x2a8] sm:$0xff]
    %v297 = vld [vmem:[#allocation7 + $0x2b0] sm:$0xff]
    %v298 = vld [vmem:[#allocation7 + $0x2b8] sm:$0xff]
    %v299 = vld [vmem:[#allocation7 + $0x2c0] sm:$0xff]
    %v300 = vld [vmem:[#allocation7 + $0x2c8] sm:$0xff]
    %v301 = vld [vmem:[#allocation7 + $0x2d0] sm:$0xff]
    %v302 = vld [vmem:[#allocation7 + $0x2d8] sm:$0xff]
    %v303 = vld [vmem:[#allocation7 + $0x2e0] sm:$0xff]
    %v304 = vld [vmem:[#allocation7 + $0x2e8] sm:$0xff]
    %v305 = vld [vmem:[#allocation7 + $0x2f0] sm:$0xff]
    %v306 = vld [vmem:[#allocation7 + $0x2f8] sm:$0xff]
    %v307 = vld [vmem:[#allocation7 + $0x300] sm:$0xff]
    %v308 = vld [vmem:[#allocation7 + $0x308] sm:$0xff]
    %v309 = vld [vmem:[#allocation7 + $0x310] sm:$0xff]
    %v310 = vld [vmem:[#allocation7 + $0x318] sm:$0xff]
    %v311 = vld [vmem:[#allocation7 + $0x320] sm:$0xff]
    %v312 = vld [vmem:[#allocation7 + $0x328] sm:$0xff]
    %v313 = vld [vmem:[#allocation7 + $0x330] sm:$0xff]
    %v314 = vld [vmem:[#allocation7 + $0x338] sm:$0xff]
    %v315 = vld [vmem:[#allocation7 + $0x340] sm:$0xff]
    %v316 = vld [vmem:[#allocation7 + $0x348] sm:$0xff]
    %v317 = vld [vmem:[#allocation7 + $0x350] sm:$0xff]
    %v318 = vld [vmem:[#allocation7 + $0x358] sm:$0xff]
    %v319 = vld [vmem:[#allocation7 + $0x360] sm:$0xff]
    %v320 = vld [vmem:[#allocation7 + $0x368] sm:$0xff]
    %v321 = vld [vmem:[#allocation7 + $0x370] sm:$0xff]
    %v322 = vld [vmem:[#allocation7 + $0x378] sm:$0xff]
    %v323 = vld [vmem:[#allocation7 + $0x380] sm:$0xff]
    %v324 = vld [vmem:[#allocation7 + $0x388] sm:$0xff]
    %v325 = vld [vmem:[#allocation7 + $0x390] sm:$0xff]
    %v326 = vld [vmem:[#allocation7 + $0x398] sm:$0xff]
    %v327 = vld [vmem:[#allocation7 + $0x3a0] sm:$0xff]
    %v328 = vld [vmem:[#allocation7 + $0x3a8] sm:$0xff]
    %v329 = vld [vmem:[#allocation7 + $0x3b0] sm:$0xff]
    %v330 = vld [vmem:[#allocation7 + $0x3b8] sm:$0xff]
    %v331 = vld [vmem:[#allocation7 + $0x3c0] sm:$0xff]
    %v332 = vld [vmem:[#allocation7 + $0x3c8] sm:$0xff]
    %v333 = vld [vmem:[#allocation7 + $0x3d0] sm:$0xff]
    %v334 = vld [vmem:[#allocation7 + $0x3d8] sm:$0xff]
    %v335 = vld [vmem:[#allocation7 + $0x3e0] sm:$0xff]
    %v336 = vld [vmem:[#allocation7 + $0x3e8] sm:$0xff]
    %v337 = vld [vmem:[#allocation7 + $0x3f0] sm:$0xff]
    %v338 = vld [vmem:[#allocation7 + $0x3f8] sm:$0xff]
    %v339 = vld [vmem:[#allocation7 + $0x400] sm:$0xff]
    %v340 = vld [vmem:[#allocation7 + $0x408] sm:$0xff]
    %v341 = vld [vmem:[#allocation7 + $0x410] sm:$0xff]
    %v342 = vld [vmem:[#allocation7 + $0x418] sm:$0xff]
    %v343 = vld [vmem:[#allocation7 + $0x420] sm:$0xff]
    %v344 = vld [vmem:[#allocation7 + $0x428] sm:$0xff]
    %v345 = vld [vmem:[#allocation7 + $0x430] sm:$0xff]
    %v346 = vld [vmem:[#allocation7 + $0x438] sm:$0xff]
    %v347 = vld [vmem:[#allocation7 + $0x440] sm:$0xff]
    %v348 = vld [vmem:[#allocation7 + $0x448] sm:$0xff]
    %v349 = vld [vmem:[#allocation7 + $0x450] sm:$0xff]
    %v350 = vld [vmem:[#allocation7 + $0x458] sm:$0xff]
    %v351 = vld [vmem:[#allocation7 + $0x460] sm:$0xff]
    %v352 = vld [vmem:[#allocation7 + $0x468] sm:$0xff]
    %v353 = vld [vmem:[#allocation7 + $0x470] sm:$0xff]
    %v354 = vld [vmem:[#allocation7 + $0x478] sm:$0xff]
    %v355 = vld [vmem:[#allocation7 + $0x480] sm:$0xff]
    %v356 = vld [vmem:[#allocation7 + $0x488] sm:$0xff]
    %v357 = vld [vmem:[#allocation7 + $0x490] sm:$0xff]
    %v358 = vld [vmem:[#allocation7 + $0x498] sm:$0xff]
    %v359 = vld [vmem:[#allocation7 + $0x4a0] sm:$0xff]
    %v360 = vld [vmem:[#allocation7 + $0x4a8] sm:$0xff]
    %v361 = vld [vmem:[#allocation7 + $0x4b0] sm:$0xff]
    %v362 = vld [vmem:[#allocation7 + $0x4b8] sm:$0xff]
    %v363 = vld [vmem:[#allocation7 + $0x4c0] sm:$0xff]
    %v364 = vld [vmem:[#allocation7 + $0x4c8] sm:$0xff]
    %v365 = vld [vmem:[#allocation7 + $0x4d0] sm:$0xff]
    %v366 = vld [vmem:[#allocation7 + $0x4d8] sm:$0xff]
    %v367 = vld [vmem:[#allocation7 + $0x4e0] sm:$0xff]
    %v368 = vld [vmem:[#allocation7 + $0x4e8] sm:$0xff]
    %v369 = vld [vmem:[#allocation7 + $0x4f0] sm:$0xff]
    %v370 = vld [vmem:[#allocation7 + $0x4f8] sm:$0xff]
    %v371 = vld [vmem:[#allocation7 + $0x500] sm:$0xff]
    %v372 = vld [vmem:[#allocation7 + $0x508] sm:$0xff]
    %v373 = vld [vmem:[#allocation7 + $0x510] sm:$0xff]
    %v374 = vld [vmem:[#allocation7 + $0x518] sm:$0xff]
    %v375 = vld [vmem:[#allocation7 + $0x520] sm:$0xff]
    %v376 = vld [vmem:[#allocation7 + $0x528] sm:$0xff]
    %v377 = vld [vmem:[#allocation7 + $0x530] sm:$0xff]
    %v378 = vld [vmem:[#allocation7 + $0x538] sm:$0xff]
    %v379 = vld [vmem:[#allocation7 + $0x540] sm:$0xff]
    %v380 = vld [vmem:[#allocation7 + $0x548] sm:$0xff]
    %v381 = vld [vmem:[#allocation7 + $0x550] sm:$0xff]
    %v382 = vld [vmem:[#allocation7 + $0x558] sm:$0xff]
    %v383 = vld [vmem:[#allocation7 + $0x560] sm:$0xff]
    %v384 = vld [vmem:[#allocation7 + $0x568] sm:$0xff]
    %v385 = vld [vmem:[#allocation7 + $0x570] sm:$0xff]
    %v386 = vld [vmem:[#allocation7 + $0x578] sm:$0xff]
    %v387 = vld [vmem:[#allocation7 + $0x580] sm:$0xff]
    %v388 = vld [vmem:[#allocation7 + $0x588] sm:$0xff]
    %v389 = vld [vmem:[#allocation7 + $0x590] sm:$0xff]
    %v390 = vld [vmem:[#allocation7 + $0x598] sm:$0xff]
    %v391 = vld [vmem:[#allocation7 + $0x5a0] sm:$0xff]
    %v392 = vld [vmem:[#allocation7 + $0x5a8] sm:$0xff]
    %v393 = vld [vmem:[#allocation7 + $0x5b0] sm:$0xff]
    %v394 = vld [vmem:[#allocation7 + $0x5b8] sm:$0xff]
    %v395 = vld [vmem:[#allocation7 + $0x5c0] sm:$0xff]
    %v396 = vld [vmem:[#allocation7 + $0x5c8] sm:$0xff]
    %v397 = vld [vmem:[#allocation7 + $0x5d0] sm:$0xff]
    %v398 = vld [vmem:[#allocation7 + $0x5d8] sm:$0xff]
    %v399 = vld [vmem:[#allocation7 + $0x5e0] sm:$0xff]
    %v400 = vld [vmem:[#allocation7 + $0x5e8] sm:$0xff]
    %v401 = vld [vmem:[#allocation7 + $0x5f0] sm:$0xff]
    %v402 = vld [vmem:[#allocation7 + $0x5f8] sm:$0xff]
    %v403 = vld [vmem:[#allocation7 + $0x600] sm:$0xff]
    %v404 = vld [vmem:[#allocation7 + $0x608] sm:$0xff]
    %v405 = vld [vmem:[#allocation7 + $0x610] sm:$0xff]
    %v406 = vld [vmem:[#allocation7 + $0x618] sm:$0xff]
    %v407 = vld [vmem:[#allocation7 + $0x620] sm:$0xff]
    %v408 = vld [vmem:[#allocation7 + $0x628] sm:$0xff]
    %v409 = vld [vmem:[#allocation7 + $0x630] sm:$0xff]
    %v410 = vld [vmem:[#allocation7 + $0x638] sm:$0xff]
    %v411 = vld [vmem:[#allocation7 + $0x640] sm:$0xff]
    %v412 = vld [vmem:[#allocation7 + $0x648] sm:$0xff]
    %v413 = vld [vmem:[#allocation7 + $0x650] sm:$0xff]
    %v414 = vld [vmem:[#allocation7 + $0x658] sm:$0xff]
    %v415 = vld [vmem:[#allocation7 + $0x660] sm:$0xff]
    %v416 = vld [vmem:[#allocation7 + $0x668] sm:$0xff]
    %v417 = vld [vmem:[#allocation7 + $0x670] sm:$0xff]
    %v418 = vld [vmem:[#allocation7 + $0x678] sm:$0xff]
    %v419 = vld [vmem:[#allocation7 + $0x680] sm:$0xff]
    %v420 = vld [vmem:[#allocation7 + $0x688] sm:$0xff]
    %v421 = vld [vmem:[#allocation7 + $0x690] sm:$0xff]
    %v422 = vld [vmem:[#allocation7 + $0x698] sm:$0xff]
    %v423 = vld [vmem:[#allocation7 + $0x6a0] sm:$0xff]
    %v424 = vld [vmem:[#allocation7 + $0x6a8] sm:$0xff]
    %v425 = vld [vmem:[#allocation7 + $0x6b0] sm:$0xff]
    %v426 = vld [vmem:[#allocation7 + $0x6b8] sm:$0xff]
    %v427 = vld [vmem:[#allocation7 + $0x6c0] sm:$0xff]
    %v428 = vld [vmem:[#allocation7 + $0x6c8] sm:$0xff]
    %v429 = vld [vmem:[#allocation7 + $0x6d0] sm:$0xff]
    %v430 = vld [vmem:[#allocation7 + $0x6d8] sm:$0xff]
    %v431 = vld [vmem:[#allocation7 + $0x6e0] sm:$0xff]
    %v432 = vld [vmem:[#allocation7 + $0x6e8] sm:$0xff]
    %v433 = vld [vmem:[#allocation7 + $0x6f0] sm:$0xff]
    %v434 = vld [vmem:[#allocation7 + $0x6f8] sm:$0xff]
    %v435 = vld [vmem:[#allocation7 + $0x700] sm:$0xff]
    %v436 = vld [vmem:[#allocation7 + $0x708] sm:$0xff]
    %v437 = vld [vmem:[#allocation7 + $0x710] sm:$0xff]
    %v438 = vld [vmem:[#allocation7 + $0x718] sm:$0xff]
    %v439 = vld [vmem:[#allocation7 + $0x720] sm:$0xff]
    %v440 = vld [vmem:[#allocation7 + $0x728] sm:$0xff]
    %v441 = vld [vmem:[#allocation7 + $0x730] sm:$0xff]
    %v442 = vld [vmem:[#allocation7 + $0x738] sm:$0xff]
    %v443 = vld [vmem:[#allocation7 + $0x740] sm:$0xff]
    %v444 = vld [vmem:[#allocation7 + $0x748] sm:$0xff]
    %v445 = vld [vmem:[#allocation7 + $0x750] sm:$0xff]
    %v446 = vld [vmem:[#allocation7 + $0x758] sm:$0xff]
    %v447 = vld [vmem:[#allocation7 + $0x760] sm:$0xff]
    %v448 = vld [vmem:[#allocation7 + $0x768] sm:$0xff]
    %v449 = vld [vmem:[#allocation7 + $0x770] sm:$0xff]
    %v450 = vld [vmem:[#allocation7 + $0x778] sm:$0xff]
    %v451 = vld [vmem:[#allocation7 + $0x780] sm:$0xff]
    %v452 = vld [vmem:[#allocation7 + $0x788] sm:$0xff]
    %v453 = vld [vmem:[#allocation7 + $0x790] sm:$0xff]
    %v454 = vld [vmem:[#allocation7 + $0x798] sm:$0xff]
    %v455 = vld [vmem:[#allocation7 + $0x7a0] sm:$0xff]
    %v456 = vld [vmem:[#allocation7 + $0x7a8] sm:$0xff]
    %v457 = vld [vmem:[#allocation7 + $0x7b0] sm:$0xff]
    %v458 = vld [vmem:[#allocation7 + $0x7b8] sm:$0xff]
    %v459 = vld [vmem:[#allocation7 + $0x7c0] sm:$0xff]
    %v460 = vld [vmem:[#allocation7 + $0x7c8] sm:$0xff]
    %v461 = vld [vmem:[#allocation7 + $0x7d0] sm:$0xff]
    %v462 = vld [vmem:[#allocation7 + $0x7d8] sm:$0xff]
    %v463 = vld [vmem:[#allocation7 + $0x7e0] sm:$0xff]
    %v464 = vld [vmem:[#allocation7 + $0x7e8] sm:$0xff]
    %v465 = vld [vmem:[#allocation7 + $0x7f0] sm:$0xff]
    %v466 = vld [vmem:[#allocation7 + $0x7f8] sm:$0xff]
    %v467 = vld [vmem:[%s3] sm:$0x3]
    %v469 = vlaneseq
    %v470 = vshrl.u32 %v469, 7
    %v471 = vsub.s32 0, %v470
    %v472 = vrot.slane %v467, %v471
    %v473 = vlaneseq
    %v474 = vshrl.u32 %v473, 7
    %v475 = vsub.s32 1, %v474
    %v476 = vrot.slane %v467, %v475
    %v735 = vunpack.c.l.b16 %v211
    %v736 = vunpack.c.h.b16 %v211
    %v737 = vunpack.c.l.b16 %v212
    %v738 = vunpack.c.h.b16 %v212
    %v739 = vunpack.c.l.b16 %v213
    %v740 = vunpack.c.h.b16 %v213
    %v741 = vunpack.c.l.b16 %v214
    %v742 = vunpack.c.h.b16 %v214
    %v743 = vunpack.c.l.b16 %v215
    %v744 = vunpack.c.h.b16 %v215
    %v745 = vunpack.c.l.b16 %v216
    %v746 = vunpack.c.h.b16 %v216
    %v747 = vunpack.c.l.b16 %v217
    %v748 = vunpack.c.h.b16 %v217
    %v749 = vunpack.c.l.b16 %v218
    %v750 = vunpack.c.h.b16 %v218
    %v751 = vunpack.c.l.b16 %v219
    %v752 = vunpack.c.h.b16 %v219
    %v753 = vunpack.c.l.b16 %v220
    %v754 = vunpack.c.h.b16 %v220
    %v755 = vunpack.c.l.b16 %v221
    %v756 = vunpack.c.h.b16 %v221
    %v757 = vunpack.c.l.b16 %v222
    %v758 = vunpack.c.h.b16 %v222
    %v759 = vunpack.c.l.b16 %v223
    %v760 = vunpack.c.h.b16 %v223
    %v761 = vunpack.c.l.b16 %v224
    %v762 = vunpack.c.h.b16 %v224
    %v763 = vunpack.c.l.b16 %v225
    %v764 = vunpack.c.h.b16 %v225
    %v765 = vunpack.c.l.b16 %v226
    %v766 = vunpack.c.h.b16 %v226
    %v767 = vunpack.c.l.b16 %v227
    %v768 = vunpack.c.h.b16 %v227
    %v769 = vunpack.c.l.b16 %v228
    %v770 = vunpack.c.h.b16 %v228
    %v771 = vunpack.c.l.b16 %v229
    %v772 = vunpack.c.h.b16 %v229
    %v773 = vunpack.c.l.b16 %v230
    %v774 = vunpack.c.h.b16 %v230
    %v775 = vunpack.c.l.b16 %v231
    %v776 = vunpack.c.h.b16 %v231
    %v777 = vunpack.c.l.b16 %v232
    %v778 = vunpack.c.h.b16 %v232
    %v779 = vunpack.c.l.b16 %v233
    %v780 = vunpack.c.h.b16 %v233
    %v781 = vunpack.c.l.b16 %v234
    %v782 = vunpack.c.h.b16 %v234
    %v783 = vunpack.c.l.b16 %v235
    %v784 = vunpack.c.h.b16 %v235
    %v785 = vunpack.c.l.b16 %v236
    %v786 = vunpack.c.h.b16 %v236
    %v787 = vunpack.c.l.b16 %v237
    %v788 = vunpack.c.h.b16 %v237
    %v789 = vunpack.c.l.b16 %v238
    %v790 = vunpack.c.h.b16 %v238
    %v791 = vunpack.c.l.b16 %v239
    %v792 = vunpack.c.h.b16 %v239
    %v793 = vunpack.c.l.b16 %v240
    %v794 = vunpack.c.h.b16 %v240
    %v795 = vunpack.c.l.b16 %v241
    %v796 = vunpack.c.h.b16 %v241
    %v797 = vunpack.c.l.b16 %v242
    %v798 = vunpack.c.h.b16 %v242
    %v799 = vunpack.c.l.b16 %v243
    %v800 = vunpack.c.h.b16 %v243
    %v801 = vunpack.c.l.b16 %v244
    %v802 = vunpack.c.h.b16 %v244
    %v803 = vunpack.c.l.b16 %v245
    %v804 = vunpack.c.h.b16 %v245
    %v805 = vunpack.c.l.b16 %v246
    %v806 = vunpack.c.h.b16 %v246
    %v807 = vunpack.c.l.b16 %v247
    %v808 = vunpack.c.h.b16 %v247
    %v809 = vunpack.c.l.b16 %v248
    %v810 = vunpack.c.h.b16 %v248
    %v811 = vunpack.c.l.b16 %v249
    %v812 = vunpack.c.h.b16 %v249
    %v813 = vunpack.c.l.b16 %v250
    %v814 = vunpack.c.h.b16 %v250
    %v815 = vunpack.c.l.b16 %v251
    %v816 = vunpack.c.h.b16 %v251
    %v817 = vunpack.c.l.b16 %v252
    %v818 = vunpack.c.h.b16 %v252
    %v819 = vunpack.c.l.b16 %v253
    %v820 = vunpack.c.h.b16 %v253
    %v821 = vunpack.c.l.b16 %v254
    %v822 = vunpack.c.h.b16 %v254
    %v823 = vunpack.c.l.b16 %v255
    %v824 = vunpack.c.h.b16 %v255
    %v825 = vunpack.c.l.b16 %v256
    %v826 = vunpack.c.h.b16 %v256
    %v827 = vunpack.c.l.b16 %v257
    %v828 = vunpack.c.h.b16 %v257
    %v829 = vunpack.c.l.b16 %v258
    %v830 = vunpack.c.h.b16 %v258
    %v831 = vunpack.c.l.b16 %v259
    %v832 = vunpack.c.h.b16 %v259
    %v833 = vunpack.c.l.b16 %v260
    %v834 = vunpack.c.h.b16 %v260
    %v835 = vunpack.c.l.b16 %v261
    %v836 = vunpack.c.h.b16 %v261
    %v837 = vunpack.c.l.b16 %v262
    %v838 = vunpack.c.h.b16 %v262
    %v839 = vunpack.c.l.b16 %v263
    %v840 = vunpack.c.h.b16 %v263
    %v841 = vunpack.c.l.b16 %v264
    %v842 = vunpack.c.h.b16 %v264
    %v843 = vunpack.c.l.b16 %v265
    %v844 = vunpack.c.h.b16 %v265
    %v845 = vunpack.c.l.b16 %v266
    %v846 = vunpack.c.h.b16 %v266
    %v847 = vunpack.c.l.b16 %v267
    %v848 = vunpack.c.h.b16 %v267
    %v849 = vunpack.c.l.b16 %v268
    %v850 = vunpack.c.h.b16 %v268
    %v851 = vunpack.c.l.b16 %v269
    %v852 = vunpack.c.h.b16 %v269
    %v853 = vunpack.c.l.b16 %v270
    %v854 = vunpack.c.h.b16 %v270
    %v855 = vunpack.c.l.b16 %v271
    %v856 = vunpack.c.h.b16 %v271
    %v857 = vunpack.c.l.b16 %v272
    %v858 = vunpack.c.h.b16 %v272
    %v859 = vunpack.c.l.b16 %v273
    %v860 = vunpack.c.h.b16 %v273
    %v861 = vunpack.c.l.b16 %v274
    %v862 = vunpack.c.h.b16 %v274
    %v863 = vunpack.c.l.b16 %v275
    %v864 = vunpack.c.h.b16 %v275
    %v865 = vunpack.c.l.b16 %v276
    %v866 = vunpack.c.h.b16 %v276
    %v867 = vunpack.c.l.b16 %v277
    %v868 = vunpack.c.h.b16 %v277
    %v869 = vunpack.c.l.b16 %v278
    %v870 = vunpack.c.h.b16 %v278
    %v871 = vunpack.c.l.b16 %v279
    %v872 = vunpack.c.h.b16 %v279
    %v873 = vunpack.c.l.b16 %v280
    %v874 = vunpack.c.h.b16 %v280
    %v875 = vunpack.c.l.b16 %v281
    %v876 = vunpack.c.h.b16 %v281
    %v877 = vunpack.c.l.b16 %v282
    %v878 = vunpack.c.h.b16 %v282
    %v879 = vunpack.c.l.b16 %v283
    %v880 = vunpack.c.h.b16 %v283
    %v881 = vunpack.c.l.b16 %v284
    %v882 = vunpack.c.h.b16 %v284
    %v883 = vunpack.c.l.b16 %v285
    %v884 = vunpack.c.h.b16 %v285
    %v885 = vunpack.c.l.b16 %v286
    %v886 = vunpack.c.h.b16 %v286
    %v887 = vunpack.c.l.b16 %v287
    %v888 = vunpack.c.h.b16 %v287
    %v889 = vunpack.c.l.b16 %v288
    %v890 = vunpack.c.h.b16 %v288
    %v891 = vunpack.c.l.b16 %v289
    %v892 = vunpack.c.h.b16 %v289
    %v893 = vunpack.c.l.b16 %v290
    %v894 = vunpack.c.h.b16 %v290
    %v895 = vunpack.c.l.b16 %v291
    %v896 = vunpack.c.h.b16 %v291
    %v897 = vunpack.c.l.b16 %v292
    %v898 = vunpack.c.h.b16 %v292
    %v899 = vunpack.c.l.b16 %v293
    %v900 = vunpack.c.h.b16 %v293
    %v901 = vunpack.c.l.b16 %v294
    %v902 = vunpack.c.h.b16 %v294
    %v903 = vunpack.c.l.b16 %v295
    %v904 = vunpack.c.h.b16 %v295
    %v905 = vunpack.c.l.b16 %v296
    %v906 = vunpack.c.h.b16 %v296
    %v907 = vunpack.c.l.b16 %v297
    %v908 = vunpack.c.h.b16 %v297
    %v909 = vunpack.c.l.b16 %v298
    %v910 = vunpack.c.h.b16 %v298
    %v911 = vunpack.c.l.b16 %v299
    %v912 = vunpack.c.h.b16 %v299
    %v913 = vunpack.c.l.b16 %v300
    %v914 = vunpack.c.h.b16 %v300
    %v915 = vunpack.c.l.b16 %v301
    %v916 = vunpack.c.h.b16 %v301
    %v917 = vunpack.c.l.b16 %v302
    %v918 = vunpack.c.h.b16 %v302
    %v919 = vunpack.c.l.b16 %v303
    %v920 = vunpack.c.h.b16 %v303
    %v921 = vunpack.c.l.b16 %v304
    %v922 = vunpack.c.h.b16 %v304
    %v923 = vunpack.c.l.b16 %v305
    %v924 = vunpack.c.h.b16 %v305
    %v925 = vunpack.c.l.b16 %v306
    %v926 = vunpack.c.h.b16 %v306
    %v927 = vunpack.c.l.b16 %v307
    %v928 = vunpack.c.h.b16 %v307
    %v929 = vunpack.c.l.b16 %v308
    %v930 = vunpack.c.h.b16 %v308
    %v931 = vunpack.c.l.b16 %v309
    %v932 = vunpack.c.h.b16 %v309
    %v933 = vunpack.c.l.b16 %v310
    %v934 = vunpack.c.h.b16 %v310
    %v935 = vunpack.c.l.b16 %v311
    %v936 = vunpack.c.h.b16 %v311
    %v937 = vunpack.c.l.b16 %v312
    %v938 = vunpack.c.h.b16 %v312
    %v939 = vunpack.c.l.b16 %v313
    %v940 = vunpack.c.h.b16 %v313
    %v941 = vunpack.c.l.b16 %v314
    %v942 = vunpack.c.h.b16 %v314
    %v943 = vunpack.c.l.b16 %v315
    %v944 = vunpack.c.h.b16 %v315
    %v945 = vunpack.c.l.b16 %v316
    %v946 = vunpack.c.h.b16 %v316
    %v947 = vunpack.c.l.b16 %v317
    %v948 = vunpack.c.h.b16 %v317
    %v949 = vunpack.c.l.b16 %v318
    %v950 = vunpack.c.h.b16 %v318
    %v951 = vunpack.c.l.b16 %v319
    %v952 = vunpack.c.h.b16 %v319
    %v953 = vunpack.c.l.b16 %v320
    %v954 = vunpack.c.h.b16 %v320
    %v955 = vunpack.c.l.b16 %v321
    %v956 = vunpack.c.h.b16 %v321
    %v957 = vunpack.c.l.b16 %v322
    %v958 = vunpack.c.h.b16 %v322
    %v959 = vunpack.c.l.b16 %v323
    %v960 = vunpack.c.h.b16 %v323
    %v961 = vunpack.c.l.b16 %v324
    %v962 = vunpack.c.h.b16 %v324
    %v963 = vunpack.c.l.b16 %v325
    %v964 = vunpack.c.h.b16 %v325
    %v965 = vunpack.c.l.b16 %v326
    %v966 = vunpack.c.h.b16 %v326
    %v967 = vunpack.c.l.b16 %v327
    %v968 = vunpack.c.h.b16 %v327
    %v969 = vunpack.c.l.b16 %v328
    %v970 = vunpack.c.h.b16 %v328
    %v971 = vunpack.c.l.b16 %v329
    %v972 = vunpack.c.h.b16 %v329
    %v973 = vunpack.c.l.b16 %v330
    %v974 = vunpack.c.h.b16 %v330
    %v975 = vunpack.c.l.b16 %v331
    %v976 = vunpack.c.h.b16 %v331
    %v977 = vunpack.c.l.b16 %v332
    %v978 = vunpack.c.h.b16 %v332
    %v979 = vunpack.c.l.b16 %v333
    %v980 = vunpack.c.h.b16 %v333
    %v981 = vunpack.c.l.b16 %v334
    %v982 = vunpack.c.h.b16 %v334
    %v983 = vunpack.c.l.b16 %v335
    %v984 = vunpack.c.h.b16 %v335
    %v985 = vunpack.c.l.b16 %v336
    %v986 = vunpack.c.h.b16 %v336
    %v987 = vunpack.c.l.b16 %v337
    %v988 = vunpack.c.h.b16 %v337
    %v989 = vunpack.c.l.b16 %v338
    %v990 = vunpack.c.h.b16 %v338
    %v991 = vunpack.c.l.b16 %v339
    %v992 = vunpack.c.h.b16 %v339
    %v993 = vunpack.c.l.b16 %v340
    %v994 = vunpack.c.h.b16 %v340
    %v995 = vunpack.c.l.b16 %v341
    %v996 = vunpack.c.h.b16 %v341
    %v997 = vunpack.c.l.b16 %v342
    %v998 = vunpack.c.h.b16 %v342
    %v999 = vunpack.c.l.b16 %v343
    %v1000 = vunpack.c.h.b16 %v343
    %v1001 = vunpack.c.l.b16 %v344
    %v1002 = vunpack.c.h.b16 %v344
    %v1003 = vunpack.c.l.b16 %v345
    %v1004 = vunpack.c.h.b16 %v345
    %v1005 = vunpack.c.l.b16 %v346
    %v1006 = vunpack.c.h.b16 %v346
    %v1007 = vunpack.c.l.b16 %v347
    %v1008 = vunpack.c.h.b16 %v347
    %v1009 = vunpack.c.l.b16 %v348
    %v1010 = vunpack.c.h.b16 %v348
    %v1011 = vunpack.c.l.b16 %v349
    %v1012 = vunpack.c.h.b16 %v349
    %v1013 = vunpack.c.l.b16 %v350
    %v1014 = vunpack.c.h.b16 %v350
    %v1015 = vunpack.c.l.b16 %v351
    %v1016 = vunpack.c.h.b16 %v351
    %v1017 = vunpack.c.l.b16 %v352
    %v1018 = vunpack.c.h.b16 %v352
    %v1019 = vunpack.c.l.b16 %v353
    %v1020 = vunpack.c.h.b16 %v353
    %v1021 = vunpack.c.l.b16 %v354
    %v1022 = vunpack.c.h.b16 %v354
    %v1023 = vunpack.c.l.b16 %v355
    %v1024 = vunpack.c.h.b16 %v355
    %v1025 = vunpack.c.l.b16 %v356
    %v1026 = vunpack.c.h.b16 %v356
    %v1027 = vunpack.c.l.b16 %v357
    %v1028 = vunpack.c.h.b16 %v357
    %v1029 = vunpack.c.l.b16 %v358
    %v1030 = vunpack.c.h.b16 %v358
    %v1031 = vunpack.c.l.b16 %v359
    %v1032 = vunpack.c.h.b16 %v359
    %v1033 = vunpack.c.l.b16 %v360
    %v1034 = vunpack.c.h.b16 %v360
    %v1035 = vunpack.c.l.b16 %v361
    %v1036 = vunpack.c.h.b16 %v361
    %v1037 = vunpack.c.l.b16 %v362
    %v1038 = vunpack.c.h.b16 %v362
    %v1039 = vunpack.c.l.b16 %v363
    %v1040 = vunpack.c.h.b16 %v363
    %v1041 = vunpack.c.l.b16 %v364
    %v1042 = vunpack.c.h.b16 %v364
    %v1043 = vunpack.c.l.b16 %v365
    %v1044 = vunpack.c.h.b16 %v365
    %v1045 = vunpack.c.l.b16 %v366
    %v1046 = vunpack.c.h.b16 %v366
    %v1047 = vunpack.c.l.b16 %v367
    %v1048 = vunpack.c.h.b16 %v367
    %v1049 = vunpack.c.l.b16 %v368
    %v1050 = vunpack.c.h.b16 %v368
    %v1051 = vunpack.c.l.b16 %v369
    %v1052 = vunpack.c.h.b16 %v369
    %v1053 = vunpack.c.l.b16 %v370
    %v1054 = vunpack.c.h.b16 %v370
    %v1055 = vunpack.c.l.b16 %v371
    %v1056 = vunpack.c.h.b16 %v371
    %v1057 = vunpack.c.l.b16 %v372
    %v1058 = vunpack.c.h.b16 %v372
    %v1059 = vunpack.c.l.b16 %v373
    %v1060 = vunpack.c.h.b16 %v373
    %v1061 = vunpack.c.l.b16 %v374
    %v1062 = vunpack.c.h.b16 %v374
    %v1063 = vunpack.c.l.b16 %v375
    %v1064 = vunpack.c.h.b16 %v375
    %v1065 = vunpack.c.l.b16 %v376
    %v1066 = vunpack.c.h.b16 %v376
    %v1067 = vunpack.c.l.b16 %v377
    %v1068 = vunpack.c.h.b16 %v377
    %v1069 = vunpack.c.l.b16 %v378
    %v1070 = vunpack.c.h.b16 %v378
    %v1071 = vunpack.c.l.b16 %v379
    %v1072 = vunpack.c.h.b16 %v379
    %v1073 = vunpack.c.l.b16 %v380
    %v1074 = vunpack.c.h.b16 %v380
    %v1075 = vunpack.c.l.b16 %v381
    %v1076 = vunpack.c.h.b16 %v381
    %v1077 = vunpack.c.l.b16 %v382
    %v1078 = vunpack.c.h.b16 %v382
    %v1079 = vunpack.c.l.b16 %v383
    %v1080 = vunpack.c.h.b16 %v383
    %v1081 = vunpack.c.l.b16 %v384
    %v1082 = vunpack.c.h.b16 %v384
    %v1083 = vunpack.c.l.b16 %v385
    %v1084 = vunpack.c.h.b16 %v385
    %v1085 = vunpack.c.l.b16 %v386
    %v1086 = vunpack.c.h.b16 %v386
    %v1087 = vunpack.c.l.b16 %v387
    %v1088 = vunpack.c.h.b16 %v387
    %v1089 = vunpack.c.l.b16 %v388
    %v1090 = vunpack.c.h.b16 %v388
    %v1091 = vunpack.c.l.b16 %v389
    %v1092 = vunpack.c.h.b16 %v389
    %v1093 = vunpack.c.l.b16 %v390
    %v1094 = vunpack.c.h.b16 %v390
    %v1095 = vunpack.c.l.b16 %v391
    %v1096 = vunpack.c.h.b16 %v391
    %v1097 = vunpack.c.l.b16 %v392
    %v1098 = vunpack.c.h.b16 %v392
    %v1099 = vunpack.c.l.b16 %v393
    %v1100 = vunpack.c.h.b16 %v393
    %v1101 = vunpack.c.l.b16 %v394
    %v1102 = vunpack.c.h.b16 %v394
    %v1103 = vunpack.c.l.b16 %v395
    %v1104 = vunpack.c.h.b16 %v395
    %v1105 = vunpack.c.l.b16 %v396
    %v1106 = vunpack.c.h.b16 %v396
    %v1107 = vunpack.c.l.b16 %v397
    %v1108 = vunpack.c.h.b16 %v397
    %v1109 = vunpack.c.l.b16 %v398
    %v1110 = vunpack.c.h.b16 %v398
    %v1111 = vunpack.c.l.b16 %v399
    %v1112 = vunpack.c.h.b16 %v399
    %v1113 = vunpack.c.l.b16 %v400
    %v1114 = vunpack.c.h.b16 %v400
    %v1115 = vunpack.c.l.b16 %v401
    %v1116 = vunpack.c.h.b16 %v401
    %v1117 = vunpack.c.l.b16 %v402
    %v1118 = vunpack.c.h.b16 %v402
    %v1119 = vunpack.c.l.b16 %v403
    %v1120 = vunpack.c.h.b16 %v403
    %v1121 = vunpack.c.l.b16 %v404
    %v1122 = vunpack.c.h.b16 %v404
    %v1123 = vunpack.c.l.b16 %v405
    %v1124 = vunpack.c.h.b16 %v405
    %v1125 = vunpack.c.l.b16 %v406
    %v1126 = vunpack.c.h.b16 %v406
    %v1127 = vunpack.c.l.b16 %v407
    %v1128 = vunpack.c.h.b16 %v407
    %v1129 = vunpack.c.l.b16 %v408
    %v1130 = vunpack.c.h.b16 %v408
    %v1131 = vunpack.c.l.b16 %v409
    %v1132 = vunpack.c.h.b16 %v409
    %v1133 = vunpack.c.l.b16 %v410
    %v1134 = vunpack.c.h.b16 %v410
    %v1135 = vunpack.c.l.b16 %v411
    %v1136 = vunpack.c.h.b16 %v411
    %v1137 = vunpack.c.l.b16 %v412
    %v1138 = vunpack.c.h.b16 %v412
    %v1139 = vunpack.c.l.b16 %v413
    %v1140 = vunpack.c.h.b16 %v413
    %v1141 = vunpack.c.l.b16 %v414
    %v1142 = vunpack.c.h.b16 %v414
    %v1143 = vunpack.c.l.b16 %v415
    %v1144 = vunpack.c.h.b16 %v415
    %v1145 = vunpack.c.l.b16 %v416
    %v1146 = vunpack.c.h.b16 %v416
    %v1147 = vunpack.c.l.b16 %v417
    %v1148 = vunpack.c.h.b16 %v417
    %v1149 = vunpack.c.l.b16 %v418
    %v1150 = vunpack.c.h.b16 %v418
    %v1151 = vunpack.c.l.b16 %v419
    %v1152 = vunpack.c.h.b16 %v419
    %v1153 = vunpack.c.l.b16 %v420
    %v1154 = vunpack.c.h.b16 %v420
    %v1155 = vunpack.c.l.b16 %v421
    %v1156 = vunpack.c.h.b16 %v421
    %v1157 = vunpack.c.l.b16 %v422
    %v1158 = vunpack.c.h.b16 %v422
    %v1159 = vunpack.c.l.b16 %v423
    %v1160 = vunpack.c.h.b16 %v423
    %v1161 = vunpack.c.l.b16 %v424
    %v1162 = vunpack.c.h.b16 %v424
    %v1163 = vunpack.c.l.b16 %v425
    %v1164 = vunpack.c.h.b16 %v425
    %v1165 = vunpack.c.l.b16 %v426
    %v1166 = vunpack.c.h.b16 %v426
    %v1167 = vunpack.c.l.b16 %v427
    %v1168 = vunpack.c.h.b16 %v427
    %v1169 = vunpack.c.l.b16 %v428
    %v1170 = vunpack.c.h.b16 %v428
    %v1171 = vunpack.c.l.b16 %v429
    %v1172 = vunpack.c.h.b16 %v429
    %v1173 = vunpack.c.l.b16 %v430
    %v1174 = vunpack.c.h.b16 %v430
    %v1175 = vunpack.c.l.b16 %v431
    %v1176 = vunpack.c.h.b16 %v431
    %v1177 = vunpack.c.l.b16 %v432
    %v1178 = vunpack.c.h.b16 %v432
    %v1179 = vunpack.c.l.b16 %v433
    %v1180 = vunpack.c.h.b16 %v433
    %v1181 = vunpack.c.l.b16 %v434
    %v1182 = vunpack.c.h.b16 %v434
    %v1183 = vunpack.c.l.b16 %v435
    %v1184 = vunpack.c.h.b16 %v435
    %v1185 = vunpack.c.l.b16 %v436
    %v1186 = vunpack.c.h.b16 %v436
    %v1187 = vunpack.c.l.b16 %v437
    %v1188 = vunpack.c.h.b16 %v437
    %v1189 = vunpack.c.l.b16 %v438
    %v1190 = vunpack.c.h.b16 %v438
    %v1191 = vunpack.c.l.b16 %v439
    %v1192 = vunpack.c.h.b16 %v439
    %v1193 = vunpack.c.l.b16 %v440
    %v1194 = vunpack.c.h.b16 %v440
    %v1195 = vunpack.c.l.b16 %v441
    %v1196 = vunpack.c.h.b16 %v441
    %v1197 = vunpack.c.l.b16 %v442
    %v1198 = vunpack.c.h.b16 %v442
    %v1199 = vunpack.c.l.b16 %v443
    %v1200 = vunpack.c.h.b16 %v443
    %v1201 = vunpack.c.l.b16 %v444
    %v1202 = vunpack.c.h.b16 %v444
    %v1203 = vunpack.c.l.b16 %v445
    %v1204 = vunpack.c.h.b16 %v445
    %v1205 = vunpack.c.l.b16 %v446
    %v1206 = vunpack.c.h.b16 %v446
    %v1207 = vunpack.c.l.b16 %v447
    %v1208 = vunpack.c.h.b16 %v447
    %v1209 = vunpack.c.l.b16 %v448
    %v1210 = vunpack.c.h.b16 %v448
    %v1211 = vunpack.c.l.b16 %v449
    %v1212 = vunpack.c.h.b16 %v449
    %v1213 = vunpack.c.l.b16 %v450
    %v1214 = vunpack.c.h.b16 %v450
    %v1215 = vunpack.c.l.b16 %v451
    %v1216 = vunpack.c.h.b16 %v451
    %v1217 = vunpack.c.l.b16 %v452
    %v1218 = vunpack.c.h.b16 %v452
    %v1219 = vunpack.c.l.b16 %v453
    %v1220 = vunpack.c.h.b16 %v453
    %v1221 = vunpack.c.l.b16 %v454
    %v1222 = vunpack.c.h.b16 %v454
    %v1223 = vunpack.c.l.b16 %v455
    %v1224 = vunpack.c.h.b16 %v455
    %v1225 = vunpack.c.l.b16 %v456
    %v1226 = vunpack.c.h.b16 %v456
    %v1227 = vunpack.c.l.b16 %v457
    %v1228 = vunpack.c.h.b16 %v457
    %v1229 = vunpack.c.l.b16 %v458
    %v1230 = vunpack.c.h.b16 %v458
    %v1231 = vunpack.c.l.b16 %v459
    %v1232 = vunpack.c.h.b16 %v459
    %v1233 = vunpack.c.l.b16 %v460
    %v1234 = vunpack.c.h.b16 %v460
    %v1235 = vunpack.c.l.b16 %v461
    %v1236 = vunpack.c.h.b16 %v461
    %v1237 = vunpack.c.l.b16 %v462
    %v1238 = vunpack.c.h.b16 %v462
    %v1239 = vunpack.c.l.b16 %v463
    %v1240 = vunpack.c.h.b16 %v463
    %v1241 = vunpack.c.l.b16 %v464
    %v1242 = vunpack.c.h.b16 %v464
    %v1243 = vunpack.c.l.b16 %v465
    %v1244 = vunpack.c.h.b16 %v465
    %v1245 = vunpack.c.l.b16 %v466
    %v1246 = vunpack.c.h.b16 %v466
    %v1247 = vpack.c.b16 %v737, %v735
    %v1248 = vpack.c.b16 %v738, %v736
    %v1249 = vpack.c.b16 %v741, %v739
    %v1250 = vpack.c.b16 %v742, %v740
    %v1251 = vpack.c.b16 %v745, %v743
    %v1252 = vpack.c.b16 %v746, %v744
    %v1253 = vpack.c.b16 %v749, %v747
    %v1254 = vpack.c.b16 %v750, %v748
    %v1255 = vpack.c.b16 %v753, %v751
    %v1256 = vpack.c.b16 %v754, %v752
    %v1257 = vpack.c.b16 %v757, %v755
    %v1258 = vpack.c.b16 %v758, %v756
    %v1259 = vpack.c.b16 %v761, %v759
    %v1260 = vpack.c.b16 %v762, %v760
    %v1261 = vpack.c.b16 %v765, %v763
    %v1262 = vpack.c.b16 %v766, %v764
    %v1263 = vpack.c.b16 %v769, %v767
    %v1264 = vpack.c.b16 %v770, %v768
    %v1265 = vpack.c.b16 %v773, %v771
    %v1266 = vpack.c.b16 %v774, %v772
    %v1267 = vpack.c.b16 %v777, %v775
    %v1268 = vpack.c.b16 %v778, %v776
    %v1269 = vpack.c.b16 %v781, %v779
    %v1270 = vpack.c.b16 %v782, %v780
    %v1271 = vpack.c.b16 %v785, %v783
    %v1272 = vpack.c.b16 %v786, %v784
    %v1273 = vpack.c.b16 %v789, %v787
    %v1274 = vpack.c.b16 %v790, %v788
    %v1275 = vpack.c.b16 %v793, %v791
    %v1276 = vpack.c.b16 %v794, %v792
    %v1277 = vpack.c.b16 %v797, %v795
    %v1278 = vpack.c.b16 %v798, %v796
    %v1279 = vpack.c.b16 %v801, %v799
    %v1280 = vpack.c.b16 %v802, %v800
    %v1281 = vpack.c.b16 %v805, %v803
    %v1282 = vpack.c.b16 %v806, %v804
    %v1283 = vpack.c.b16 %v809, %v807
    %v1284 = vpack.c.b16 %v810, %v808
    %v1285 = vpack.c.b16 %v813, %v811
    %v1286 = vpack.c.b16 %v814, %v812
    %v1287 = vpack.c.b16 %v817, %v815
    %v1288 = vpack.c.b16 %v818, %v816
    %v1289 = vpack.c.b16 %v821, %v819
    %v1290 = vpack.c.b16 %v822, %v820
    %v1291 = vpack.c.b16 %v825, %v823
    %v1292 = vpack.c.b16 %v826, %v824
    %v1293 = vpack.c.b16 %v829, %v827
    %v1294 = vpack.c.b16 %v830, %v828
    %v1295 = vpack.c.b16 %v833, %v831
    %v1296 = vpack.c.b16 %v834, %v832
    %v1297 = vpack.c.b16 %v837, %v835
    %v1298 = vpack.c.b16 %v838, %v836
    %v1299 = vpack.c.b16 %v841, %v839
    %v1300 = vpack.c.b16 %v842, %v840
    %v1301 = vpack.c.b16 %v845, %v843
    %v1302 = vpack.c.b16 %v846, %v844
    %v1303 = vpack.c.b16 %v849, %v847
    %v1304 = vpack.c.b16 %v850, %v848
    %v1305 = vpack.c.b16 %v853, %v851
    %v1306 = vpack.c.b16 %v854, %v852
    %v1307 = vpack.c.b16 %v857, %v855
    %v1308 = vpack.c.b16 %v858, %v856
    %v1309 = vpack.c.b16 %v861, %v859
    %v1310 = vpack.c.b16 %v862, %v860
    %v1311 = vpack.c.b16 %v865, %v863
    %v1312 = vpack.c.b16 %v866, %v864
    %v1313 = vpack.c.b16 %v869, %v867
    %v1314 = vpack.c.b16 %v870, %v868
    %v1315 = vpack.c.b16 %v873, %v871
    %v1316 = vpack.c.b16 %v874, %v872
    %v1317 = vpack.c.b16 %v877, %v875
    %v1318 = vpack.c.b16 %v878, %v876
    %v1319 = vpack.c.b16 %v881, %v879
    %v1320 = vpack.c.b16 %v882, %v880
    %v1321 = vpack.c.b16 %v885, %v883
    %v1322 = vpack.c.b16 %v886, %v884
    %v1323 = vpack.c.b16 %v889, %v887
    %v1324 = vpack.c.b16 %v890, %v888
    %v1325 = vpack.c.b16 %v893, %v891
    %v1326 = vpack.c.b16 %v894, %v892
    %v1327 = vpack.c.b16 %v897, %v895
    %v1328 = vpack.c.b16 %v898, %v896
    %v1329 = vpack.c.b16 %v901, %v899
    %v1330 = vpack.c.b16 %v902, %v900
    %v1331 = vpack.c.b16 %v905, %v903
    %v1332 = vpack.c.b16 %v906, %v904
    %v1333 = vpack.c.b16 %v909, %v907
    %v1334 = vpack.c.b16 %v910, %v908
    %v1335 = vpack.c.b16 %v913, %v911
    %v1336 = vpack.c.b16 %v914, %v912
    %v1337 = vpack.c.b16 %v917, %v915
    %v1338 = vpack.c.b16 %v918, %v916
    %v1339 = vpack.c.b16 %v921, %v919
    %v1340 = vpack.c.b16 %v922, %v920
    %v1341 = vpack.c.b16 %v925, %v923
    %v1342 = vpack.c.b16 %v926, %v924
    %v1343 = vpack.c.b16 %v929, %v927
    %v1344 = vpack.c.b16 %v930, %v928
    %v1345 = vpack.c.b16 %v933, %v931
    %v1346 = vpack.c.b16 %v934, %v932
    %v1347 = vpack.c.b16 %v937, %v935
    %v1348 = vpack.c.b16 %v938, %v936
    %v1349 = vpack.c.b16 %v941, %v939
    %v1350 = vpack.c.b16 %v942, %v940
    %v1351 = vpack.c.b16 %v945, %v943
    %v1352 = vpack.c.b16 %v946, %v944
    %v1353 = vpack.c.b16 %v949, %v947
    %v1354 = vpack.c.b16 %v950, %v948
    %v1355 = vpack.c.b16 %v953, %v951
    %v1356 = vpack.c.b16 %v954, %v952
    %v1357 = vpack.c.b16 %v957, %v955
    %v1358 = vpack.c.b16 %v958, %v956
    %v1359 = vpack.c.b16 %v961, %v959
    %v1360 = vpack.c.b16 %v962, %v960
    %v1361 = vpack.c.b16 %v965, %v963
    %v1362 = vpack.c.b16 %v966, %v964
    %v1363 = vpack.c.b16 %v969, %v967
    %v1364 = vpack.c.b16 %v970, %v968
    %v1365 = vpack.c.b16 %v973, %v971
    %v1366 = vpack.c.b16 %v974, %v972
    %v1367 = vpack.c.b16 %v977, %v975
    %v1368 = vpack.c.b16 %v978, %v976
    %v1369 = vpack.c.b16 %v981, %v979
    %v1370 = vpack.c.b16 %v982, %v980
    %v1371 = vpack.c.b16 %v985, %v983
    %v1372 = vpack.c.b16 %v986, %v984
    %v1373 = vpack.c.b16 %v989, %v987
    %v1374 = vpack.c.b16 %v990, %v988
    %v1375 = vpack.c.b16 %v993, %v991
    %v1376 = vpack.c.b16 %v994, %v992
    %v1377 = vpack.c.b16 %v997, %v995
    %v1378 = vpack.c.b16 %v998, %v996
    %v1379 = vpack.c.b16 %v1001, %v999
    %v1380 = vpack.c.b16 %v1002, %v1000
    %v1381 = vpack.c.b16 %v1005, %v1003
    %v1382 = vpack.c.b16 %v1006, %v1004
    %v1383 = vpack.c.b16 %v1009, %v1007
    %v1384 = vpack.c.b16 %v1010, %v1008
    %v1385 = vpack.c.b16 %v1013, %v1011
    %v1386 = vpack.c.b16 %v1014, %v1012
    %v1387 = vpack.c.b16 %v1017, %v1015
    %v1388 = vpack.c.b16 %v1018, %v1016
    %v1389 = vpack.c.b16 %v1021, %v1019
    %v1390 = vpack.c.b16 %v1022, %v1020
    %v1391 = vpack.c.b16 %v1025, %v1023
    %v1392 = vpack.c.b16 %v1026, %v1024
    %v1393 = vpack.c.b16 %v1029, %v1027
    %v1394 = vpack.c.b16 %v1030, %v1028
    %v1395 = vpack.c.b16 %v1033, %v1031
    %v1396 = vpack.c.b16 %v1034, %v1032
    %v1397 = vpack.c.b16 %v1037, %v1035
    %v1398 = vpack.c.b16 %v1038, %v1036
    %v1399 = vpack.c.b16 %v1041, %v1039
    %v1400 = vpack.c.b16 %v1042, %v1040
    %v1401 = vpack.c.b16 %v1045, %v1043
    %v1402 = vpack.c.b16 %v1046, %v1044
    %v1403 = vpack.c.b16 %v1049, %v1047
    %v1404 = vpack.c.b16 %v1050, %v1048
    %v1405 = vpack.c.b16 %v1053, %v1051
    %v1406 = vpack.c.b16 %v1054, %v1052
    %v1407 = vpack.c.b16 %v1057, %v1055
    %v1408 = vpack.c.b16 %v1058, %v1056
    %v1409 = vpack.c.b16 %v1061, %v1059
    %v1410 = vpack.c.b16 %v1062, %v1060
    %v1411 = vpack.c.b16 %v1065, %v1063
    %v1412 = vpack.c.b16 %v1066, %v1064
    %v1413 = vpack.c.b16 %v1069, %v1067
    %v1414 = vpack.c.b16 %v1070, %v1068
    %v1415 = vpack.c.b16 %v1073, %v1071
    %v1416 = vpack.c.b16 %v1074, %v1072
    %v1417 = vpack.c.b16 %v1077, %v1075
    %v1418 = vpack.c.b16 %v1078, %v1076
    %v1419 = vpack.c.b16 %v1081, %v1079
    %v1420 = vpack.c.b16 %v1082, %v1080
    %v1421 = vpack.c.b16 %v1085, %v1083
    %v1422 = vpack.c.b16 %v1086, %v1084
    %v1423 = vpack.c.b16 %v1089, %v1087
    %v1424 = vpack.c.b16 %v1090, %v1088
    %v1425 = vpack.c.b16 %v1093, %v1091
    %v1426 = vpack.c.b16 %v1094, %v1092
    %v1427 = vpack.c.b16 %v1097, %v1095
    %v1428 = vpack.c.b16 %v1098, %v1096
    %v1429 = vpack.c.b16 %v1101, %v1099
    %v1430 = vpack.c.b16 %v1102, %v1100
    %v1431 = vpack.c.b16 %v1105, %v1103
    %v1432 = vpack.c.b16 %v1106, %v1104
    %v1433 = vpack.c.b16 %v1109, %v1107
    %v1434 = vpack.c.b16 %v1110, %v1108
    %v1435 = vpack.c.b16 %v1113, %v1111
    %v1436 = vpack.c.b16 %v1114, %v1112
    %v1437 = vpack.c.b16 %v1117, %v1115
    %v1438 = vpack.c.b16 %v1118, %v1116
    %v1439 = vpack.c.b16 %v1121, %v1119
    %v1440 = vpack.c.b16 %v1122, %v1120
    %v1441 = vpack.c.b16 %v1125, %v1123
    %v1442 = vpack.c.b16 %v1126, %v1124
    %v1443 = vpack.c.b16 %v1129, %v1127
    %v1444 = vpack.c.b16 %v1130, %v1128
    %v1445 = vpack.c.b16 %v1133, %v1131
    %v1446 = vpack.c.b16 %v1134, %v1132
    %v1447 = vpack.c.b16 %v1137, %v1135
    %v1448 = vpack.c.b16 %v1138, %v1136
    %v1449 = vpack.c.b16 %v1141, %v1139
    %v1450 = vpack.c.b16 %v1142, %v1140
    %v1451 = vpack.c.b16 %v1145, %v1143
    %v1452 = vpack.c.b16 %v1146, %v1144
    %v1453 = vpack.c.b16 %v1149, %v1147
    %v1454 = vpack.c.b16 %v1150, %v1148
    %v1455 = vpack.c.b16 %v1153, %v1151
    %v1456 = vpack.c.b16 %v1154, %v1152
    %v1457 = vpack.c.b16 %v1157, %v1155
    %v1458 = vpack.c.b16 %v1158, %v1156
    %v1459 = vpack.c.b16 %v1161, %v1159
    %v1460 = vpack.c.b16 %v1162, %v1160
    %v1461 = vpack.c.b16 %v1165, %v1163
    %v1462 = vpack.c.b16 %v1166, %v1164
    %v1463 = vpack.c.b16 %v1169, %v1167
    %v1464 = vpack.c.b16 %v1170, %v1168
    %v1465 = vpack.c.b16 %v1173, %v1171
    %v1466 = vpack.c.b16 %v1174, %v1172
    %v1467 = vpack.c.b16 %v1177, %v1175
    %v1468 = vpack.c.b16 %v1178, %v1176
    %v1469 = vpack.c.b16 %v1181, %v1179
    %v1470 = vpack.c.b16 %v1182, %v1180
    %v1471 = vpack.c.b16 %v1185, %v1183
    %v1472 = vpack.c.b16 %v1186, %v1184
    %v1473 = vpack.c.b16 %v1189, %v1187
    %v1474 = vpack.c.b16 %v1190, %v1188
    %v1475 = vpack.c.b16 %v1193, %v1191
    %v1476 = vpack.c.b16 %v1194, %v1192
    %v1477 = vpack.c.b16 %v1197, %v1195
    %v1478 = vpack.c.b16 %v1198, %v1196
    %v1479 = vpack.c.b16 %v1201, %v1199
    %v1480 = vpack.c.b16 %v1202, %v1200
    %v1481 = vpack.c.b16 %v1205, %v1203
    %v1482 = vpack.c.b16 %v1206, %v1204
    %v1483 = vpack.c.b16 %v1209, %v1207
    %v1484 = vpack.c.b16 %v1210, %v1208
    %v1485 = vpack.c.b16 %v1213, %v1211
    %v1486 = vpack.c.b16 %v1214, %v1212
    %v1487 = vpack.c.b16 %v1217, %v1215
    %v1488 = vpack.c.b16 %v1218, %v1216
    %v1489 = vpack.c.b16 %v1221, %v1219
    %v1490 = vpack.c.b16 %v1222, %v1220
    %v1491 = vpack.c.b16 %v1225, %v1223
    %v1492 = vpack.c.b16 %v1226, %v1224
    %v1493 = vpack.c.b16 %v1229, %v1227
    %v1494 = vpack.c.b16 %v1230, %v1228
    %v1495 = vpack.c.b16 %v1233, %v1231
    %v1496 = vpack.c.b16 %v1234, %v1232
    %v1497 = vpack.c.b16 %v1237, %v1235
    %v1498 = vpack.c.b16 %v1238, %v1236
    %v1499 = vpack.c.b16 %v1241, %v1239
    %v1500 = vpack.c.b16 %v1242, %v1240
    %v1501 = vpack.c.b16 %v1245, %v1243
    %v1502 = vpack.c.b16 %v1246, %v1244
    %1759 = vmatprep.subr.bf16.mxu0 %v1248
    %1760 = vmatpush1.bf16.msra.mxu0 %v1247
    %1761 = vmatprep.subr.bf16.mxu0 %v1250
    %1762 = vmatpush1.bf16.msra.mxu0 %v1249
    %1763 = vmatprep.subr.bf16.mxu0 %v1252
    %1764 = vmatpush1.bf16.msra.mxu0 %v1251
    %1765 = vmatprep.subr.bf16.mxu0 %v1254
    %1766 = vmatpush1.bf16.msra.mxu0 %v1253
    %1767 = vmatprep.subr.bf16.mxu0 %v1256
    %1768 = vmatpush1.bf16.msra.mxu0 %v1255
    %1769 = vmatprep.subr.bf16.mxu0 %v1258
    %1770 = vmatpush1.bf16.msra.mxu0 %v1257
    %1771 = vmatprep.subr.bf16.mxu0 %v1260
    %1772 = vmatpush1.bf16.msra.mxu0 %v1259
    %1773 = vmatprep.subr.bf16.mxu0 %v1262
    %1774 = vmatpush1.bf16.msra.mxu0 %v1261
    %1775 = vmatprep.subr.bf16.mxu0 %v1264
    %1776 = vmatpush1.bf16.msra.mxu0 %v1263
    %1777 = vmatprep.subr.bf16.mxu0 %v1266
    %1778 = vmatpush1.bf16.msra.mxu0 %v1265
    %1779 = vmatprep.subr.bf16.mxu0 %v1268
    %1780 = vmatpush1.bf16.msra.mxu0 %v1267
    %1781 = vmatprep.subr.bf16.mxu0 %v1270
    %1782 = vmatpush1.bf16.msra.mxu0 %v1269
    %1783 = vmatprep.subr.bf16.mxu0 %v1272
    %1784 = vmatpush1.bf16.msra.mxu0 %v1271
    %1785 = vmatprep.subr.bf16.mxu0 %v1274
    %1786 = vmatpush1.bf16.msra.mxu0 %v1273
    %1787 = vmatprep.subr.bf16.mxu0 %v1276
    %1788 = vmatpush1.bf16.msra.mxu0 %v1275
    %1789 = vmatprep.subr.bf16.mxu0 %v1278
    %1790 = vmatpush1.bf16.msra.mxu0 %v1277
    %1791 = vmatprep.mubr.bf16.mxu0 %v144
    %1792 = vmatmul.mubr.bf16.gmra.mrb[0].mxu0 %v143
    %v1793 = vpop.f32.mrb[0].mxu0
    %v1794 = vadd.f32 %v472, %v1793
    %v1795 = vpop.f32.mrb[0].mxu0
    %v1796 = vadd.f32 %v476, %v1795
    %v1797 = vpop.f32.mrb[0].mxu0
    %v1798 = vadd.f32 %v472, %v1797
    %v1799 = vpop.f32.mrb[0].mxu0
    %v1800 = vadd.f32 %v476, %v1799
    %1801 = vmatprep.mubr.bf16.mxu0 %v160
    %1802 = vmatmul.mubr.bf16.gmra.mrb[0].mxu0 %v159
    %v1803 = vpop.f32.mrb[0].mxu0
    %v1804 = vadd.f32 %v472, %v1803
    %v1805 = vpop.f32.mrb[0].mxu0
    %v1806 = vadd.f32 %v476, %v1805
    %v1807 = vpop.f32.mrb[0].mxu0
    %v1808 = vadd.f32 %v472, %v1807
    %v1809 = vpop.f32.mrb[0].mxu0
    %v1810 = vadd.f32 %v476, %v1809
    %1811 = vdwg.mxu0
    %1812 = vmatprep.subr.bf16.mxu0 %v1280
    %1813 = vmatpush1.bf16.msra.mxu0 %v1279
    %1814 = vmatprep.subr.bf16.mxu0 %v1282
    %1815 = vmatpush1.bf16.msra.mxu0 %v1281
    %1816 = vmatprep.subr.bf16.mxu0 %v1284
    %1817 = vmatpush1.bf16.msra.mxu0 %v1283
    %1818 = vmatprep.subr.bf16.mxu0 %v1286
    %1819 = vmatpush1.bf16.msra.mxu0 %v1285
    %1820 = vmatprep.subr.bf16.mxu0 %v1288
    %1821 = vmatpush1.bf16.msra.mxu0 %v1287
    %1822 = vmatprep.subr.bf16.mxu0 %v1290
    %1823 = vmatpush1.bf16.msra.mxu0 %v1289
    %1824 = vmatprep.subr.bf16.mxu0 %v1292
    %1825 = vmatpush1.bf16.msra.mxu0 %v1291
    %1826 = vmatprep.subr.bf16.mxu0 %v1294
    %1827 = vmatpush1.bf16.msra.mxu0 %v1293
    %1828 = vmatprep.subr.bf16.mxu0 %v1296
    %1829 = vmatpush1.bf16.msra.mxu0 %v1295
    %1830 = vmatprep.subr.bf16.mxu0 %v1298
    %1831 = vmatpush1.bf16.msra.mxu0 %v1297
    %1832 = vmatprep.subr.bf16.mxu0 %v1300
    %1833 = vmatpush1.bf16.msra.mxu0 %v1299
    %1834 = vmatprep.subr.bf16.mxu0 %v1302
    %1835 = vmatpush1.bf16.msra.mxu0 %v1301
    %1836 = vmatprep.subr.bf16.mxu0 %v1304
    %1837 = vmatpush1.bf16.msra.mxu0 %v1303
    %1838 = vmatprep.subr.bf16.mxu0 %v1306
    %1839 = vmatpush1.bf16.msra.mxu0 %v1305
    %1840 = vmatprep.subr.bf16.mxu0 %v1308
    %1841 = vmatpush1.bf16.msra.mxu0 %v1307
    %1842 = vmatprep.subr.bf16.mxu0 %v1310
    %1843 = vmatpush1.bf16.msra.mxu0 %v1309
    %1844 = vmatprep.mubr.bf16.mxu0 %v146
    %1845 = vmatmul.mubr.bf16.gmra.mrb[0].mxu0 %v145
    %v1846 = vpop.f32.mrb[0].mxu0
    %v1847 = vadd.f32 %v1794, %v1846
    %v1848 = vpop.f32.mrb[0].mxu0
    %v1849 = vadd.f32 %v1796, %v1848
    %v1850 = vpop.f32.mrb[0].mxu0
    %v1851 = vadd.f32 %v1798, %v1850
    %v1852 = vpop.f32.mrb[0].mxu0
    %v1853 = vadd.f32 %v1800, %v1852
    %1854 = vmatprep.mubr.bf16.mxu0 %v162
    %1855 = vmatmul.mubr.bf16.gmra.mrb[0].mxu0 %v161
    %v1856 = vpop.f32.mrb[0].mxu0
    %v1857 = vadd.f32 %v1804, %v1856
    %v1858 = vpop.f32.mrb[0].mxu0
    %v1859 = vadd.f32 %v1806, %v1858
    %v1860 = vpop.f32.mrb[0].mxu0
    %v1861 = vadd.f32 %v1808, %v1860
    %v1862 = vpop.f32.mrb[0].mxu0
    %v1863 = vadd.f32 %v1810, %v1862
    %1864 = vdwg.mxu0
    %1865 = vmatprep.subr.bf16.mxu0 %v1312
    %1866 = vmatpush1.bf16.msra.mxu0 %v1311
    %1867 = vmatprep.subr.bf16.mxu0 %v1314
    %1868 = vmatpush1.bf16.msra.mxu0 %v1313
    %1869 = vmatprep.subr.bf16.mxu0 %v1316
    %1870 = vmatpush1.bf16.msra.mxu0 %v1315
    %1871 = vmatprep.subr.bf16.mxu0 %v1318
    %1872 = vmatpush1.bf16.msra.mxu0 %v1317
    %1873 = vmatprep.subr.bf16.mxu0 %v1320
    %1874 = vmatpush1.bf16.msra.mxu0 %v1319
    %1875 = vmatprep.subr.bf16.mxu0 %v1322
    %1876 = vmatpush1.bf16.msra.mxu0 %v1321
    %1877 = vmatprep.subr.bf16.mxu0 %v1324
    %1878 = vmatpush1.bf16.msra.mxu0 %v1323
    %1879 = vmatprep.subr.bf16.mxu0 %v1326
    %1880 = vmatpush1.bf16.msra.mxu0 %v1325
    %1881 = vmatprep.subr.bf16.mxu0 %v1328
    %1882 = vmatpush1.bf16.msra.mxu0 %v1327
    %1883 = vmatprep.subr.bf16.mxu0 %v1330
    %1884 = vmatpush1.bf16.msra.mxu0 %v1329
    %1885 = vmatprep.subr.bf16.mxu0 %v1332
    %1886 = vmatpush1.bf16.msra.mxu0 %v1331
    %1887 = vmatprep.subr.bf16.mxu0 %v1334
    %1888 = vmatpush1.bf16.msra.mxu0 %v1333
    %1889 = vmatprep.subr.bf16.mxu0 %v1336
    %1890 = vmatpush1.bf16.msra.mxu0 %v1335
    %1891 = vmatprep.subr.bf16.mxu0 %v1338
    %1892 = vmatpush1.bf16.msra.mxu0 %v1337
    %1893 = vmatprep.subr.bf16.mxu0 %v1340
    %1894 = vmatpush1.bf16.msra.mxu0 %v1339
    %1895 = vmatprep.subr.bf16.mxu0 %v1342
    %1896 = vmatpush1.bf16.msra.mxu0 %v1341
    %1897 = vmatprep.mubr.bf16.mxu0 %v148
    %1898 = vmatmul.mubr.bf16.gmra.mrb[0].mxu0 %v147
    %v1899 = vpop.f32.mrb[0].mxu0
    %v1900 = vadd.f32 %v1847, %v1899
    %v1901 = vpop.f32.mrb[0].mxu0
    %v1902 = vadd.f32 %v1849, %v1901
    %v1903 = vpop.f32.mrb[0].mxu0
    %v1904 = vadd.f32 %v1851, %v1903
    %v1905 = vpop.f32.mrb[0].mxu0
    %v1906 = vadd.f32 %v1853, %v1905
    %1907 = vmatprep.mubr.bf16.mxu0 %v164
    %1908 = vmatmul.mubr.bf16.gmra.mrb[0].mxu0 %v163
    %v1909 = vpop.f32.mrb[0].mxu0
    %v1910 = vadd.f32 %v1857, %v1909
    %v1911 = vpop.f32.mrb[0].mxu0
    %v1912 = vadd.f32 %v1859, %v1911
    %v1913 = vpop.f32.mrb[0].mxu0
    %v1914 = vadd.f32 %v1861, %v1913
    %v1915 = vpop.f32.mrb[0].mxu0
    %v1916 = vadd.f32 %v1863, %v1915
    %1917 = vdwg.mxu0
    %1918 = vmatprep.subr.bf16.mxu0 %v1344
    %1919 = vmatpush1.bf16.msra.mxu0 %v1343
    %1920 = vmatprep.subr.bf16.mxu0 %v1346
    %1921 = vmatpush1.bf16.msra.mxu0 %v1345
    %1922 = vmatprep.subr.bf16.mxu0 %v1348
    %1923 = vmatpush1.bf16.msra.mxu0 %v1347
    %1924 = vmatprep.subr.bf16.mxu0 %v1350
    %1925 = vmatpush1.bf16.msra.mxu0 %v1349
    %1926 = vmatprep.subr.bf16.mxu0 %v1352
    %1927 = vmatpush1.bf16.msra.mxu0 %v1351
    %1928 = vmatprep.subr.bf16.mxu0 %v1354
    %1929 = vmatpush1.bf16.msra.mxu0 %v1353
    %1930 = vmatprep.subr.bf16.mxu0 %v1356
    %1931 = vmatpush1.bf16.msra.mxu0 %v1355
    %1932 = vmatprep.subr.bf16.mxu0 %v1358
    %1933 = vmatpush1.bf16.msra.mxu0 %v1357
    %1934 = vmatprep.subr.bf16.mxu0 %v1360
    %1935 = vmatpush1.bf16.msra.mxu0 %v1359
    %1936 = vmatprep.subr.bf16.mxu0 %v1362
    %1937 = vmatpush1.bf16.msra.mxu0 %v1361
    %1938 = vmatprep.subr.bf16.mxu0 %v1364
    %1939 = vmatpush1.bf16.msra.mxu0 %v1363
    %1940 = vmatprep.subr.bf16.mxu0 %v1366
    %1941 = vmatpush1.bf16.msra.mxu0 %v1365
    %1942 = vmatprep.subr.bf16.mxu0 %v1368
    %1943 = vmatpush1.bf16.msra.mxu0 %v1367
    %1944 = vmatprep.subr.bf16.mxu0 %v1370
    %1945 = vmatpush1.bf16.msra.mxu0 %v1369
    %1946 = vmatprep.subr.bf16.mxu0 %v1372
    %1947 = vmatpush1.bf16.msra.mxu0 %v1371
    %1948 = vmatprep.subr.bf16.mxu0 %v1374
    %1949 = vmatpush1.bf16.msra.mxu0 %v1373
    %1950 = vmatprep.mubr.bf16.mxu0 %v150
    %1951 = vmatmul.mubr.bf16.gmra.mrb[0].mxu0 %v149
    %v1952 = vpop.f32.mrb[0].mxu0
    %v1953 = vadd.f32 %v1900, %v1952
    %v1954 = vpop.f32.mrb[0].mxu0
    %v1955 = vadd.f32 %v1902, %v1954
    %v1956 = vpop.f32.mrb[0].mxu0
    %v1957 = vadd.f32 %v1904, %v1956
    %v1958 = vpop.f32.mrb[0].mxu0
    %v1959 = vadd.f32 %v1906, %v1958
    %1960 = vmatprep.mubr.bf16.mxu0 %v166
    %1961 = vmatmul.mubr.bf16.gmra.mrb[0].mxu0 %v165
    %v1962 = vpop.f32.mrb[0].mxu0
    %v1963 = vadd.f32 %v1910, %v1962
    %v1964 = vpop.f32.mrb[0].mxu0
    %v1965 = vadd.f32 %v1912, %v1964
    %v1966 = vpop.f32.mrb[0].mxu0
    %v1967 = vadd.f32 %v1914, %v1966
    %v1968 = vpop.f32.mrb[0].mxu0
    %v1969 = vadd.f32 %v1916, %v1968
    %1970 = vdwg.mxu0
    %1971 = vmatprep.subr.bf16.mxu0 %v1376
    %1972 = vmatpush1.bf16.msra.mxu0 %v1375
    %1973 = vmatprep.subr.bf16.mxu0 %v1378
    %1974 = vmatpush1.bf16.msra.mxu0 %v1377
    %1975 = vmatprep.subr.bf16.mxu0 %v1380
    %1976 = vmatpush1.bf16.msra.mxu0 %v1379
    %1977 = vmatprep.subr.bf16.mxu0 %v1382
    %1978 = vmatpush1.bf16.msra.mxu0 %v1381
    %1979 = vmatprep.subr.bf16.mxu0 %v1384
    %1980 = vmatpush1.bf16.msra.mxu0 %v1383
    %1981 = vmatprep.subr.bf16.mxu0 %v1386
    %1982 = vmatpush1.bf16.msra.mxu0 %v1385
    %1983 = vmatprep.subr.bf16.mxu0 %v1388
    %1984 = vmatpush1.bf16.msra.mxu0 %v1387
    %1985 = vmatprep.subr.bf16.mxu0 %v1390
    %1986 = vmatpush1.bf16.msra.mxu0 %v1389
    %1987 = vmatprep.subr.bf16.mxu0 %v1392
    %1988 = vmatpush1.bf16.msra.mxu0 %v1391
    %1989 = vmatprep.subr.bf16.mxu0 %v1394
    %1990 = vmatpush1.bf16.msra.mxu0 %v1393
    %1991 = vmatprep.subr.bf16.mxu0 %v1396
    %1992 = vmatpush1.bf16.msra.mxu0 %v1395
    %1993 = vmatprep.subr.bf16.mxu0 %v1398
    %1994 = vmatpush1.bf16.msra.mxu0 %v1397
    %1995 = vmatprep.subr.bf16.mxu0 %v1400
    %1996 = vmatpush1.bf16.msra.mxu0 %v1399
    %1997 = vmatprep.subr.bf16.mxu0 %v1402
    %1998 = vmatpush1.bf16.msra.mxu0 %v1401
    %1999 = vmatprep.subr.bf16.mxu0 %v1404
    %2000 = vmatpush1.bf16.msra.mxu0 %v1403
    %2001 = vmatprep.subr.bf16.mxu0 %v1406
    %2002 = vmatpush1.bf16.msra.mxu0 %v1405
    %2003 = vmatprep.mubr.bf16.mxu0 %v152
    %2004 = vmatmul.mubr.bf16.gmra.mrb[0].mxu0 %v151
    %v2005 = vpop.f32.mrb[0].mxu0
    %v2006 = vadd.f32 %v1953, %v2005
    %v2007 = vpop.f32.mrb[0].mxu0
    %v2008 = vadd.f32 %v1955, %v2007
    %v2009 = vpop.f32.mrb[0].mxu0
    %v2010 = vadd.f32 %v1957, %v2009
    %v2011 = vpop.f32.mrb[0].mxu0
    %v2012 = vadd.f32 %v1959, %v2011
    %2013 = vmatprep.mubr.bf16.mxu0 %v168
    %2014 = vmatmul.mubr.bf16.gmra.mrb[0].mxu0 %v167
    %v2015 = vpop.f32.mrb[0].mxu0
    %v2016 = vadd.f32 %v1963, %v2015
    %v2017 = vpop.f32.mrb[0].mxu0
    %v2018 = vadd.f32 %v1965, %v2017
    %v2019 = vpop.f32.mrb[0].mxu0
    %v2020 = vadd.f32 %v1967, %v2019
    %v2021 = vpop.f32.mrb[0].mxu0
    %v2022 = vadd.f32 %v1969, %v2021
    %2023 = vdwg.mxu0
    %2024 = vmatprep.subr.bf16.mxu0 %v1408
    %2025 = vmatpush1.bf16.msra.mxu0 %v1407
    %2026 = vmatprep.subr.bf16.mxu0 %v1410
    %2027 = vmatpush1.bf16.msra.mxu0 %v1409
    %2028 = vmatprep.subr.bf16.mxu0 %v1412
    %2029 = vmatpush1.bf16.msra.mxu0 %v1411
    %2030 = vmatprep.subr.bf16.mxu0 %v1414
    %2031 = vmatpush1.bf16.msra.mxu0 %v1413
    %2032 = vmatprep.subr.bf16.mxu0 %v1416
    %2033 = vmatpush1.bf16.msra.mxu0 %v1415
    %2034 = vmatprep.subr.bf16.mxu0 %v1418
    %2035 = vmatpush1.bf16.msra.mxu0 %v1417
    %2036 = vmatprep.subr.bf16.mxu0 %v1420
    %2037 = vmatpush1.bf16.msra.mxu0 %v1419
    %2038 = vmatprep.subr.bf16.mxu0 %v1422
    %2039 = vmatpush1.bf16.msra.mxu0 %v1421
    %2040 = vmatprep.subr.bf16.mxu0 %v1424
    %2041 = vmatpush1.bf16.msra.mxu0 %v1423
    %2042 = vmatprep.subr.bf16.mxu0 %v1426
    %2043 = vmatpush1.bf16.msra.mxu0 %v1425
    %2044 = vmatprep.subr.bf16.mxu0 %v1428
    %2045 = vmatpush1.bf16.msra.mxu0 %v1427
    %2046 = vmatprep.subr.bf16.mxu0 %v1430
    %2047 = vmatpush1.bf16.msra.mxu0 %v1429
    %2048 = vmatprep.subr.bf16.mxu0 %v1432
    %2049 = vmatpush1.bf16.msra.mxu0 %v1431
    %2050 = vmatprep.subr.bf16.mxu0 %v1434
    %2051 = vmatpush1.bf16.msra.mxu0 %v1433
    %2052 = vmatprep.subr.bf16.mxu0 %v1436
    %2053 = vmatpush1.bf16.msra.mxu0 %v1435
    %2054 = vmatprep.subr.bf16.mxu0 %v1438
    %2055 = vmatpush1.bf16.msra.mxu0 %v1437
    %2056 = vmatprep.mubr.bf16.mxu0 %v154
    %2057 = vmatmul.mubr.bf16.gmra.mrb[0].mxu0 %v153
    %v2058 = vpop.f32.mrb[0].mxu0
    %v2059 = vadd.f32 %v2006, %v2058
    %v2060 = vpop.f32.mrb[0].mxu0
    %v2061 = vadd.f32 %v2008, %v2060
    %v2062 = vpop.f32.mrb[0].mxu0
    %v2063 = vadd.f32 %v2010, %v2062
    %v2064 = vpop.f32.mrb[0].mxu0
    %v2065 = vadd.f32 %v2012, %v2064
    %2066 = vmatprep.mubr.bf16.mxu0 %v170
    %2067 = vmatmul.mubr.bf16.gmra.mrb[0].mxu0 %v169
    %v2068 = vpop.f32.mrb[0].mxu0
    %v2069 = vadd.f32 %v2016, %v2068
    %v2070 = vpop.f32.mrb[0].mxu0
    %v2071 = vadd.f32 %v2018, %v2070
    %v2072 = vpop.f32.mrb[0].mxu0
    %v2073 = vadd.f32 %v2020, %v2072
    %v2074 = vpop.f32.mrb[0].mxu0
    %v2075 = vadd.f32 %v2022, %v2074
    %2076 = vdwg.mxu0
    %2077 = vmatprep.subr.bf16.mxu0 %v1440
    %2078 = vmatpush1.bf16.msra.mxu0 %v1439
    %2079 = vmatprep.subr.bf16.mxu0 %v1442
    %2080 = vmatpush1.bf16.msra.mxu0 %v1441
    %2081 = vmatprep.subr.bf16.mxu0 %v1444
    %2082 = vmatpush1.bf16.msra.mxu0 %v1443
    %2083 = vmatprep.subr.bf16.mxu0 %v1446
    %2084 = vmatpush1.bf16.msra.mxu0 %v1445
    %2085 = vmatprep.subr.bf16.mxu0 %v1448
    %2086 = vmatpush1.bf16.msra.mxu0 %v1447
    %2087 = vmatprep.subr.bf16.mxu0 %v1450
    %2088 = vmatpush1.bf16.msra.mxu0 %v1449
    %2089 = vmatprep.subr.bf16.mxu0 %v1452
    %2090 = vmatpush1.bf16.msra.mxu0 %v1451
    %2091 = vmatprep.subr.bf16.mxu0 %v1454
    %2092 = vmatpush1.bf16.msra.mxu0 %v1453
    %2093 = vmatprep.subr.bf16.mxu0 %v1456
    %2094 = vmatpush1.bf16.msra.mxu0 %v1455
    %2095 = vmatprep.subr.bf16.mxu0 %v1458
    %2096 = vmatpush1.bf16.msra.mxu0 %v1457
    %2097 = vmatprep.subr.bf16.mxu0 %v1460
    %2098 = vmatpush1.bf16.msra.mxu0 %v1459
    %2099 = vmatprep.subr.bf16.mxu0 %v1462
    %2100 = vmatpush1.bf16.msra.mxu0 %v1461
    %2101 = vmatprep.subr.bf16.mxu0 %v1464
    %2102 = vmatpush1.bf16.msra.mxu0 %v1463
    %2103 = vmatprep.subr.bf16.mxu0 %v1466
    %2104 = vmatpush1.bf16.msra.mxu0 %v1465
    %2105 = vmatprep.subr.bf16.mxu0 %v1468
    %2106 = vmatpush1.bf16.msra.mxu0 %v1467
    %2107 = vmatprep.subr.bf16.mxu0 %v1470
    %2108 = vmatpush1.bf16.msra.mxu0 %v1469
    %2109 = vmatprep.mubr.bf16.mxu0 %v156
    %2110 = vmatmul.mubr.bf16.gmra.mrb[0].mxu0 %v155
    %v2111 = vpop.f32.mrb[0].mxu0
    %v2112 = vadd.f32 %v2059, %v2111
    %v2113 = vpop.f32.mrb[0].mxu0
    %v2114 = vadd.f32 %v2061, %v2113
    %v2115 = vpop.f32.mrb[0].mxu0
    %v2116 = vadd.f32 %v2063, %v2115
    %v2117 = vpop.f32.mrb[0].mxu0
    %v2118 = vadd.f32 %v2065, %v2117
    %2119 = vmatprep.mubr.bf16.mxu0 %v172
    %2120 = vmatmul.mubr.bf16.gmra.mrb[0].mxu0 %v171
    %v2121 = vpop.f32.mrb[0].mxu0
    %v2122 = vadd.f32 %v2069, %v2121
    %v2123 = vpop.f32.mrb[0].mxu0
    %v2124 = vadd.f32 %v2071, %v2123
    %v2125 = vpop.f32.mrb[0].mxu0
    %v2126 = vadd.f32 %v2073, %v2125
    %v2127 = vpop.f32.mrb[0].mxu0
    %v2128 = vadd.f32 %v2075, %v2127
    %2129 = vdwg.mxu0
    %2130 = vmatprep.subr.bf16.mxu0 %v1472
    %2131 = vmatpush1.bf16.msra.mxu0 %v1471
    %2132 = vmatprep.subr.bf16.mxu0 %v1474
    %2133 = vmatpush1.bf16.msra.mxu0 %v1473
    %2134 = vmatprep.subr.bf16.mxu0 %v1476
    %2135 = vmatpush1.bf16.msra.mxu0 %v1475
    %2136 = vmatprep.subr.bf16.mxu0 %v1478
    %2137 = vmatpush1.bf16.msra.mxu0 %v1477
    %2138 = vmatprep.subr.bf16.mxu0 %v1480
    %2139 = vmatpush1.bf16.msra.mxu0 %v1479
    %2140 = vmatprep.subr.bf16.mxu0 %v1482
    %2141 = vmatpush1.bf16.msra.mxu0 %v1481
    %2142 = vmatprep.subr.bf16.mxu0 %v1484
    %2143 = vmatpush1.bf16.msra.mxu0 %v1483
    %2144 = vmatprep.subr.bf16.mxu0 %v1486
    %2145 = vmatpush1.bf16.msra.mxu0 %v1485
    %2146 = vmatprep.subr.bf16.mxu0 %v1488
    %2147 = vmatpush1.bf16.msra.mxu0 %v1487
    %2148 = vmatprep.subr.bf16.mxu0 %v1490
    %2149 = vmatpush1.bf16.msra.mxu0 %v1489
    %2150 = vmatprep.subr.bf16.mxu0 %v1492
    %2151 = vmatpush1.bf16.msra.mxu0 %v1491
    %2152 = vmatprep.subr.bf16.mxu0 %v1494
    %2153 = vmatpush1.bf16.msra.mxu0 %v1493
    %2154 = vmatprep.subr.bf16.mxu0 %v1496
    %2155 = vmatpush1.bf16.msra.mxu0 %v1495
    %2156 = vmatprep.subr.bf16.mxu0 %v1498
    %2157 = vmatpush1.bf16.msra.mxu0 %v1497
    %2158 = vmatprep.subr.bf16.mxu0 %v1500
    %2159 = vmatpush1.bf16.msra.mxu0 %v1499
    %2160 = vmatprep.subr.bf16.mxu0 %v1502
    %2161 = vmatpush1.bf16.msra.mxu0 %v1501
    %2162 = vmatprep.mubr.bf16.mxu0 %v158
    %2163 = vmatmul.mubr.bf16.gmra.mrb[0].mxu0 %v157
    %v2164 = vpop.f32.mrb[0].mxu0
    %v2165 = vadd.f32 %v2112, %v2164
    %v2166 = vpop.f32.mrb[0].mxu0
    %v2167 = vadd.f32 %v2114, %v2166
    %v2168 = vpop.f32.mrb[0].mxu0
    %v2169 = vadd.f32 %v2116, %v2168
    %v2170 = vpop.f32.mrb[0].mxu0
    %v2171 = vadd.f32 %v2118, %v2170
    %2172 = vmatprep.mubr.bf16.mxu0 %v174
    %2173 = vmatmul.mubr.bf16.gmra.mrb[0].mxu0 %v173
    %v2174 = vpop.f32.mrb[0].mxu0
    %v2175 = vadd.f32 %v2122, %v2174
    %v2176 = vpop.f32.mrb[0].mxu0
    %v2177 = vadd.f32 %v2124, %v2176
    %v2178 = vpop.f32.mrb[0].mxu0
    %v2179 = vadd.f32 %v2126, %v2178
    %v2180 = vpop.f32.mrb[0].mxu0
    %v2181 = vadd.f32 %v2128, %v2180
    %2182 = vdwg.mxu0
    %v2183 = vld [vmem:[#allocation8] sm:$0xff]
    %v2184 = vld [vmem:[#allocation8 + $0x8] sm:$0xff]
    %v2185 = vld [vmem:[#allocation8 + $0x10] sm:$0xff]
    %v2186 = vld [vmem:[#allocation8 + $0x18] sm:$0xff]
    %v2187 = vld [vmem:[#allocation8 + $0x20] sm:$0xff]
    %v2188 = vld [vmem:[#allocation8 + $0x28] sm:$0xff]
    %v2189 = vld [vmem:[#allocation8 + $0x30] sm:$0xff]
    %v2190 = vld [vmem:[#allocation8 + $0x38] sm:$0xff]
    %v2191 = vld [vmem:[#allocation8 + $0x40] sm:$0xff]
    %v2192 = vld [vmem:[#allocation8 + $0x48] sm:$0xff]
    %v2193 = vld [vmem:[#allocation8 + $0x50] sm:$0xff]
    %v2194 = vld [vmem:[#allocation8 + $0x58] sm:$0xff]
    %v2195 = vld [vmem:[#allocation8 + $0x60] sm:$0xff]
    %v2196 = vld [vmem:[#allocation8 + $0x68] sm:$0xff]
    %v2197 = vld [vmem:[#allocation8 + $0x70] sm:$0xff]
    %v2198 = vld [vmem:[#allocation8 + $0x78] sm:$0xff]
    %v2199 = vld [vmem:[#allocation8 + $0x80] sm:$0xff]
    %v2200 = vld [vmem:[#allocation8 + $0x88] sm:$0xff]
    %v2201 = vld [vmem:[#allocation8 + $0x90] sm:$0xff]
    %v2202 = vld [vmem:[#allocation8 + $0x98] sm:$0xff]
    %v2203 = vld [vmem:[#allocation8 + $0xa0] sm:$0xff]
    %v2204 = vld [vmem:[#allocation8 + $0xa8] sm:$0xff]
    %v2205 = vld [vmem:[#allocation8 + $0xb0] sm:$0xff]
    %v2206 = vld [vmem:[#allocation8 + $0xb8] sm:$0xff]
    %v2207 = vld [vmem:[#allocation8 + $0xc0] sm:$0xff]
    %v2208 = vld [vmem:[#allocation8 + $0xc8] sm:$0xff]
    %v2209 = vld [vmem:[#allocation8 + $0xd0] sm:$0xff]
    %v2210 = vld [vmem:[#allocation8 + $0xd8] sm:$0xff]
    %v2211 = vld [vmem:[#allocation8 + $0xe0] sm:$0xff]
    %v2212 = vld [vmem:[#allocation8 + $0xe8] sm:$0xff]
    %v2213 = vld [vmem:[#allocation8 + $0xf0] sm:$0xff]
    %v2214 = vld [vmem:[#allocation8 + $0xf8] sm:$0xff]
    %v2215 = vld [vmem:[#allocation8 + $0x100] sm:$0xff]
    %v2216 = vld [vmem:[#allocation8 + $0x108] sm:$0xff]
    %v2217 = vld [vmem:[#allocation8 + $0x110] sm:$0xff]
    %v2218 = vld [vmem:[#allocation8 + $0x118] sm:$0xff]
    %v2219 = vld [vmem:[#allocation8 + $0x120] sm:$0xff]
    %v2220 = vld [vmem:[#allocation8 + $0x128] sm:$0xff]
    %v2221 = vld [vmem:[#allocation8 + $0x130] sm:$0xff]
    %v2222 = vld [vmem:[#allocation8 + $0x138] sm:$0xff]
    %v2223 = vld [vmem:[#allocation8 + $0x140] sm:$0xff]
    %v2224 = vld [vmem:[#allocation8 + $0x148] sm:$0xff]
    %v2225 = vld [vmem:[#allocation8 + $0x150] sm:$0xff]
    %v2226 = vld [vmem:[#allocation8 + $0x158] sm:$0xff]
    %v2227 = vld [vmem:[#allocation8 + $0x160] sm:$0xff]
    %v2228 = vld [vmem:[#allocation8 + $0x168] sm:$0xff]
    %v2229 = vld [vmem:[#allocation8 + $0x170] sm:$0xff]
    %v2230 = vld [vmem:[#allocation8 + $0x178] sm:$0xff]
    %v2231 = vld [vmem:[#allocation8 + $0x180] sm:$0xff]
    %v2232 = vld [vmem:[#allocation8 + $0x188] sm:$0xff]
    %v2233 = vld [vmem:[#allocation8 + $0x190] sm:$0xff]
    %v2234 = vld [vmem:[#allocation8 + $0x198] sm:$0xff]
    %v2235 = vld [vmem:[#allocation8 + $0x1a0] sm:$0xff]
    %v2236 = vld [vmem:[#allocation8 + $0x1a8] sm:$0xff]
    %v2237 = vld [vmem:[#allocation8 + $0x1b0] sm:$0xff]
    %v2238 = vld [vmem:[#allocation8 + $0x1b8] sm:$0xff]
    %v2239 = vld [vmem:[#allocation8 + $0x1c0] sm:$0xff]
    %v2240 = vld [vmem:[#allocation8 + $0x1c8] sm:$0xff]
    %v2241 = vld [vmem:[#allocation8 + $0x1d0] sm:$0xff]
    %v2242 = vld [vmem:[#allocation8 + $0x1d8] sm:$0xff]
    %v2243 = vld [vmem:[#allocation8 + $0x1e0] sm:$0xff]
    %v2244 = vld [vmem:[#allocation8 + $0x1e8] sm:$0xff]
    %v2245 = vld [vmem:[#allocation8 + $0x1f0] sm:$0xff]
    %v2246 = vld [vmem:[#allocation8 + $0x1f8] sm:$0xff]
    %v2247 = vld [vmem:[#allocation8 + $0x200] sm:$0xff]
    %v2248 = vld [vmem:[#allocation8 + $0x208] sm:$0xff]
    %v2249 = vld [vmem:[#allocation8 + $0x210] sm:$0xff]
    %v2250 = vld [vmem:[#allocation8 + $0x218] sm:$0xff]
    %v2251 = vld [vmem:[#allocation8 + $0x220] sm:$0xff]
    %v2252 = vld [vmem:[#allocation8 + $0x228] sm:$0xff]
    %v2253 = vld [vmem:[#allocation8 + $0x230] sm:$0xff]
    %v2254 = vld [vmem:[#allocation8 + $0x238] sm:$0xff]
    %v2255 = vld [vmem:[#allocation8 + $0x240] sm:$0xff]
    %v2256 = vld [vmem:[#allocation8 + $0x248] sm:$0xff]
    %v2257 = vld [vmem:[#allocation8 + $0x250] sm:$0xff]
    %v2258 = vld [vmem:[#allocation8 + $0x258] sm:$0xff]
    %v2259 = vld [vmem:[#allocation8 + $0x260] sm:$0xff]
    %v2260 = vld [vmem:[#allocation8 + $0x268] sm:$0xff]
    %v2261 = vld [vmem:[#allocation8 + $0x270] sm:$0xff]
    %v2262 = vld [vmem:[#allocation8 + $0x278] sm:$0xff]
    %v2263 = vld [vmem:[#allocation8 + $0x280] sm:$0xff]
    %v2264 = vld [vmem:[#allocation8 + $0x288] sm:$0xff]
    %v2265 = vld [vmem:[#allocation8 + $0x290] sm:$0xff]
    %v2266 = vld [vmem:[#allocation8 + $0x298] sm:$0xff]
    %v2267 = vld [vmem:[#allocation8 + $0x2a0] sm:$0xff]
    %v2268 = vld [vmem:[#allocation8 + $0x2a8] sm:$0xff]
    %v2269 = vld [vmem:[#allocation8 + $0x2b0] sm:$0xff]
    %v2270 = vld [vmem:[#allocation8 + $0x2b8] sm:$0xff]
    %v2271 = vld [vmem:[#allocation8 + $0x2c0] sm:$0xff]
    %v2272 = vld [vmem:[#allocation8 + $0x2c8] sm:$0xff]
    %v2273 = vld [vmem:[#allocation8 + $0x2d0] sm:$0xff]
    %v2274 = vld [vmem:[#allocation8 + $0x2d8] sm:$0xff]
    %v2275 = vld [vmem:[#allocation8 + $0x2e0] sm:$0xff]
    %v2276 = vld [vmem:[#allocation8 + $0x2e8] sm:$0xff]
    %v2277 = vld [vmem:[#allocation8 + $0x2f0] sm:$0xff]
    %v2278 = vld [vmem:[#allocation8 + $0x2f8] sm:$0xff]
    %v2279 = vld [vmem:[%s5] sm:$0x3]
    %v2281 = vlaneseq
    %v2282 = vshrl.u32 %v2281, 7
    %v2283 = vsub.s32 0, %v2282
    %v2284 = vrot.slane %v2279, %v2283
    %v2285 = vlaneseq
    %v2286 = vshrl.u32 %v2285, 7
    %v2287 = vsub.s32 1, %v2286
    %v2288 = vrot.slane %v2279, %v2287
    %v2387 = vunpack.c.l.b16 %v2183
    %v2388 = vunpack.c.h.b16 %v2183
    %v2389 = vunpack.c.l.b16 %v2184
    %v2390 = vunpack.c.h.b16 %v2184
    %v2391 = vunpack.c.l.b16 %v2185
    %v2392 = vunpack.c.h.b16 %v2185
    %v2393 = vunpack.c.l.b16 %v2186
    %v2394 = vunpack.c.h.b16 %v2186
    %v2395 = vunpack.c.l.b16 %v2187
    %v2396 = vunpack.c.h.b16 %v2187
    %v2397 = vunpack.c.l.b16 %v2188
    %v2398 = vunpack.c.h.b16 %v2188
    %v2399 = vunpack.c.l.b16 %v2189
    %v2400 = vunpack.c.h.b16 %v2189
    %v2401 = vunpack.c.l.b16 %v2190
    %v2402 = vunpack.c.h.b16 %v2190
    %v2403 = vunpack.c.l.b16 %v2191
    %v2404 = vunpack.c.h.b16 %v2191
    %v2405 = vunpack.c.l.b16 %v2192
    %v2406 = vunpack.c.h.b16 %v2192
    %v2407 = vunpack.c.l.b16 %v2193
    %v2408 = vunpack.c.h.b16 %v2193
    %v2409 = vunpack.c.l.b16 %v2194
    %v2410 = vunpack.c.h.b16 %v2194
    %v2411 = vunpack.c.l.b16 %v2195
    %v2412 = vunpack.c.h.b16 %v2195
    %v2413 = vunpack.c.l.b16 %v2196
    %v2414 = vunpack.c.h.b16 %v2196
    %v2415 = vunpack.c.l.b16 %v2197
    %v2416 = vunpack.c.h.b16 %v2197
    %v2417 = vunpack.c.l.b16 %v2198
    %v2418 = vunpack.c.h.b16 %v2198
    %v2419 = vunpack.c.l.b16 %v2199
    %v2420 = vunpack.c.h.b16 %v2199
    %v2421 = vunpack.c.l.b16 %v2200
    %v2422 = vunpack.c.h.b16 %v2200
    %v2423 = vunpack.c.l.b16 %v2201
    %v2424 = vunpack.c.h.b16 %v2201
    %v2425 = vunpack.c.l.b16 %v2202
    %v2426 = vunpack.c.h.b16 %v2202
    %v2427 = vunpack.c.l.b16 %v2203
    %v2428 = vunpack.c.h.b16 %v2203
    %v2429 = vunpack.c.l.b16 %v2204
    %v2430 = vunpack.c.h.b16 %v2204
    %v2431 = vunpack.c.l.b16 %v2205
    %v2432 = vunpack.c.h.b16 %v2205
    %v2433 = vunpack.c.l.b16 %v2206
    %v2434 = vunpack.c.h.b16 %v2206
    %v2435 = vunpack.c.l.b16 %v2207
    %v2436 = vunpack.c.h.b16 %v2207
    %v2437 = vunpack.c.l.b16 %v2208
    %v2438 = vunpack.c.h.b16 %v2208
    %v2439 = vunpack.c.l.b16 %v2209
    %v2440 = vunpack.c.h.b16 %v2209
    %v2441 = vunpack.c.l.b16 %v2210
    %v2442 = vunpack.c.h.b16 %v2210
    %v2443 = vunpack.c.l.b16 %v2211
    %v2444 = vunpack.c.h.b16 %v2211
    %v2445 = vunpack.c.l.b16 %v2212
    %v2446 = vunpack.c.h.b16 %v2212
    %v2447 = vunpack.c.l.b16 %v2213
    %v2448 = vunpack.c.h.b16 %v2213
    %v2449 = vunpack.c.l.b16 %v2214
    %v2450 = vunpack.c.h.b16 %v2214
    %v2451 = vunpack.c.l.b16 %v2215
    %v2452 = vunpack.c.h.b16 %v2215
    %v2453 = vunpack.c.l.b16 %v2216
    %v2454 = vunpack.c.h.b16 %v2216
    %v2455 = vunpack.c.l.b16 %v2217
    %v2456 = vunpack.c.h.b16 %v2217
    %v2457 = vunpack.c.l.b16 %v2218
    %v2458 = vunpack.c.h.b16 %v2218
    %v2459 = vunpack.c.l.b16 %v2219
    %v2460 = vunpack.c.h.b16 %v2219
    %v2461 = vunpack.c.l.b16 %v2220
    %v2462 = vunpack.c.h.b16 %v2220
    %v2463 = vunpack.c.l.b16 %v2221
    %v2464 = vunpack.c.h.b16 %v2221
    %v2465 = vunpack.c.l.b16 %v2222
    %v2466 = vunpack.c.h.b16 %v2222
    %v2467 = vunpack.c.l.b16 %v2223
    %v2468 = vunpack.c.h.b16 %v2223
    %v2469 = vunpack.c.l.b16 %v2224
    %v2470 = vunpack.c.h.b16 %v2224
    %v2471 = vunpack.c.l.b16 %v2225
    %v2472 = vunpack.c.h.b16 %v2225
    %v2473 = vunpack.c.l.b16 %v2226
    %v2474 = vunpack.c.h.b16 %v2226
    %v2475 = vunpack.c.l.b16 %v2227
    %v2476 = vunpack.c.h.b16 %v2227
    %v2477 = vunpack.c.l.b16 %v2228
    %v2478 = vunpack.c.h.b16 %v2228
    %v2479 = vunpack.c.l.b16 %v2229
    %v2480 = vunpack.c.h.b16 %v2229
    %v2481 = vunpack.c.l.b16 %v2230
    %v2482 = vunpack.c.h.b16 %v2230
    %v2483 = vunpack.c.l.b16 %v2231
    %v2484 = vunpack.c.h.b16 %v2231
    %v2485 = vunpack.c.l.b16 %v2232
    %v2486 = vunpack.c.h.b16 %v2232
    %v2487 = vunpack.c.l.b16 %v2233
    %v2488 = vunpack.c.h.b16 %v2233
    %v2489 = vunpack.c.l.b16 %v2234
    %v2490 = vunpack.c.h.b16 %v2234
    %v2491 = vunpack.c.l.b16 %v2235
    %v2492 = vunpack.c.h.b16 %v2235
    %v2493 = vunpack.c.l.b16 %v2236
    %v2494 = vunpack.c.h.b16 %v2236
    %v2495 = vunpack.c.l.b16 %v2237
    %v2496 = vunpack.c.h.b16 %v2237
    %v2497 = vunpack.c.l.b16 %v2238
    %v2498 = vunpack.c.h.b16 %v2238
    %v2499 = vunpack.c.l.b16 %v2239
    %v2500 = vunpack.c.h.b16 %v2239
    %v2501 = vunpack.c.l.b16 %v2240
    %v2502 = vunpack.c.h.b16 %v2240
    %v2503 = vunpack.c.l.b16 %v2241
    %v2504 = vunpack.c.h.b16 %v2241
    %v2505 = vunpack.c.l.b16 %v2242
    %v2506 = vunpack.c.h.b16 %v2242
    %v2507 = vunpack.c.l.b16 %v2243
    %v2508 = vunpack.c.h.b16 %v2243
    %v2509 = vunpack.c.l.b16 %v2244
    %v2510 = vunpack.c.h.b16 %v2244
    %v2511 = vunpack.c.l.b16 %v2245
    %v2512 = vunpack.c.h.b16 %v2245
    %v2513 = vunpack.c.l.b16 %v2246
    %v2514 = vunpack.c.h.b16 %v2246
    %v2515 = vunpack.c.l.b16 %v2247
    %v2516 = vunpack.c.h.b16 %v2247
    %v2517 = vunpack.c.l.b16 %v2248
    %v2518 = vunpack.c.h.b16 %v2248
    %v2519 = vunpack.c.l.b16 %v2249
    %v2520 = vunpack.c.h.b16 %v2249
    %v2521 = vunpack.c.l.b16 %v2250
    %v2522 = vunpack.c.h.b16 %v2250
    %v2523 = vunpack.c.l.b16 %v2251
    %v2524 = vunpack.c.h.b16 %v2251
    %v2525 = vunpack.c.l.b16 %v2252
    %v2526 = vunpack.c.h.b16 %v2252
    %v2527 = vunpack.c.l.b16 %v2253
    %v2528 = vunpack.c.h.b16 %v2253
    %v2529 = vunpack.c.l.b16 %v2254
    %v2530 = vunpack.c.h.b16 %v2254
    %v2531 = vunpack.c.l.b16 %v2255
    %v2532 = vunpack.c.h.b16 %v2255
    %v2533 = vunpack.c.l.b16 %v2256
    %v2534 = vunpack.c.h.b16 %v2256
    %v2535 = vunpack.c.l.b16 %v2257
    %v2536 = vunpack.c.h.b16 %v2257
    %v2537 = vunpack.c.l.b16 %v2258
    %v2538 = vunpack.c.h.b16 %v2258
    %v2539 = vunpack.c.l.b16 %v2259
    %v2540 = vunpack.c.h.b16 %v2259
    %v2541 = vunpack.c.l.b16 %v2260
    %v2542 = vunpack.c.h.b16 %v2260
    %v2543 = vunpack.c.l.b16 %v2261
    %v2544 = vunpack.c.h.b16 %v2261
    %v2545 = vunpack.c.l.b16 %v2262
    %v2546 = vunpack.c.h.b16 %v2262
    %v2547 = vunpack.c.l.b16 %v2263
    %v2548 = vunpack.c.h.b16 %v2263
    %v2549 = vunpack.c.l.b16 %v2264
    %v2550 = vunpack.c.h.b16 %v2264
    %v2551 = vunpack.c.l.b16 %v2265
    %v2552 = vunpack.c.h.b16 %v2265
    %v2553 = vunpack.c.l.b16 %v2266
    %v2554 = vunpack.c.h.b16 %v2266
    %v2555 = vunpack.c.l.b16 %v2267
    %v2556 = vunpack.c.h.b16 %v2267
    %v2557 = vunpack.c.l.b16 %v2268
    %v2558 = vunpack.c.h.b16 %v2268
    %v2559 = vunpack.c.l.b16 %v2269
    %v2560 = vunpack.c.h.b16 %v2269
    %v2561 = vunpack.c.l.b16 %v2270
    %v2562 = vunpack.c.h.b16 %v2270
    %v2563 = vunpack.c.l.b16 %v2271
    %v2564 = vunpack.c.h.b16 %v2271
    %v2565 = vunpack.c.l.b16 %v2272
    %v2566 = vunpack.c.h.b16 %v2272
    %v2567 = vunpack.c.l.b16 %v2273
    %v2568 = vunpack.c.h.b16 %v2273
    %v2569 = vunpack.c.l.b16 %v2274
    %v2570 = vunpack.c.h.b16 %v2274
    %v2571 = vunpack.c.l.b16 %v2275
    %v2572 = vunpack.c.h.b16 %v2275
    %v2573 = vunpack.c.l.b16 %v2276
    %v2574 = vunpack.c.h.b16 %v2276
    %v2575 = vunpack.c.l.b16 %v2277
    %v2576 = vunpack.c.h.b16 %v2277
    %v2577 = vunpack.c.l.b16 %v2278
    %v2578 = vunpack.c.h.b16 %v2278
    %v2579 = vpack.c.b16 %v2389, %v2387
    %v2580 = vpack.c.b16 %v2390, %v2388
    %v2581 = vpack.c.b16 %v2393, %v2391
    %v2582 = vpack.c.b16 %v2394, %v2392
    %v2583 = vpack.c.b16 %v2397, %v2395
    %v2584 = vpack.c.b16 %v2398, %v2396
    %v2585 = vpack.c.b16 %v2401, %v2399
    %v2586 = vpack.c.b16 %v2402, %v2400
    %v2587 = vpack.c.b16 %v2405, %v2403
    %v2588 = vpack.c.b16 %v2406, %v2404
    %v2589 = vpack.c.b16 %v2409, %v2407
    %v2590 = vpack.c.b16 %v2410, %v2408
    %v2591 = vpack.c.b16 %v2413, %v2411
    %v2592 = vpack.c.b16 %v2414, %v2412
    %v2593 = vpack.c.b16 %v2417, %v2415
    %v2594 = vpack.c.b16 %v2418, %v2416
    %v2595 = vpack.c.b16 %v2421, %v2419
    %v2596 = vpack.c.b16 %v2422, %v2420
    %v2597 = vpack.c.b16 %v2425, %v2423
    %v2598 = vpack.c.b16 %v2426, %v2424
    %v2599 = vpack.c.b16 %v2429, %v2427
    %v2600 = vpack.c.b16 %v2430, %v2428
    %v2601 = vpack.c.b16 %v2433, %v2431
    %v2602 = vpack.c.b16 %v2434, %v2432
    %v2603 = vpack.c.b16 %v2437, %v2435
    %v2604 = vpack.c.b16 %v2438, %v2436
    %v2605 = vpack.c.b16 %v2441, %v2439
    %v2606 = vpack.c.b16 %v2442, %v2440
    %v2607 = vpack.c.b16 %v2445, %v2443
    %v2608 = vpack.c.b16 %v2446, %v2444
    %v2609 = vpack.c.b16 %v2449, %v2447
    %v2610 = vpack.c.b16 %v2450, %v2448
    %v2611 = vpack.c.b16 %v2453, %v2451
    %v2612 = vpack.c.b16 %v2454, %v2452
    %v2613 = vpack.c.b16 %v2457, %v2455
    %v2614 = vpack.c.b16 %v2458, %v2456
    %v2615 = vpack.c.b16 %v2461, %v2459
    %v2616 = vpack.c.b16 %v2462, %v2460
    %v2617 = vpack.c.b16 %v2465, %v2463
    %v2618 = vpack.c.b16 %v2466, %v2464
    %v2619 = vpack.c.b16 %v2469, %v2467
    %v2620 = vpack.c.b16 %v2470, %v2468
    %v2621 = vpack.c.b16 %v2473, %v2471
    %v2622 = vpack.c.b16 %v2474, %v2472
    %v2623 = vpack.c.b16 %v2477, %v2475
    %v2624 = vpack.c.b16 %v2478, %v2476
    %v2625 = vpack.c.b16 %v2481, %v2479
    %v2626 = vpack.c.b16 %v2482, %v2480
    %v2627 = vpack.c.b16 %v2485, %v2483
    %v2628 = vpack.c.b16 %v2486, %v2484
    %v2629 = vpack.c.b16 %v2489, %v2487
    %v2630 = vpack.c.b16 %v2490, %v2488
    %v2631 = vpack.c.b16 %v2493, %v2491
    %v2632 = vpack.c.b16 %v2494, %v2492
    %v2633 = vpack.c.b16 %v2497, %v2495
    %v2634 = vpack.c.b16 %v2498, %v2496
    %v2635 = vpack.c.b16 %v2501, %v2499
    %v2636 = vpack.c.b16 %v2502, %v2500
    %v2637 = vpack.c.b16 %v2505, %v2503
    %v2638 = vpack.c.b16 %v2506, %v2504
    %v2639 = vpack.c.b16 %v2509, %v2507
    %v2640 = vpack.c.b16 %v2510, %v2508
    %v2641 = vpack.c.b16 %v2513, %v2511
    %v2642 = vpack.c.b16 %v2514, %v2512
    %v2643 = vpack.c.b16 %v2517, %v2515
    %v2644 = vpack.c.b16 %v2518, %v2516
    %v2645 = vpack.c.b16 %v2521, %v2519
    %v2646 = vpack.c.b16 %v2522, %v2520
    %v2647 = vpack.c.b16 %v2525, %v2523
    %v2648 = vpack.c.b16 %v2526, %v2524
    %v2649 = vpack.c.b16 %v2529, %v2527
    %v2650 = vpack.c.b16 %v2530, %v2528
    %v2651 = vpack.c.b16 %v2533, %v2531
    %v2652 = vpack.c.b16 %v2534, %v2532
    %v2653 = vpack.c.b16 %v2537, %v2535
    %v2654 = vpack.c.b16 %v2538, %v2536
    %v2655 = vpack.c.b16 %v2541, %v2539
    %v2656 = vpack.c.b16 %v2542, %v2540
    %v2657 = vpack.c.b16 %v2545, %v2543
    %v2658 = vpack.c.b16 %v2546, %v2544
    %v2659 = vpack.c.b16 %v2549, %v2547
    %v2660 = vpack.c.b16 %v2550, %v2548
    %v2661 = vpack.c.b16 %v2553, %v2551
    %v2662 = vpack.c.b16 %v2554, %v2552
    %v2663 = vpack.c.b16 %v2557, %v2555
    %v2664 = vpack.c.b16 %v2558, %v2556
    %v2665 = vpack.c.b16 %v2561, %v2559
    %v2666 = vpack.c.b16 %v2562, %v2560
    %v2667 = vpack.c.b16 %v2565, %v2563
    %v2668 = vpack.c.b16 %v2566, %v2564
    %v2669 = vpack.c.b16 %v2569, %v2567
    %v2670 = vpack.c.b16 %v2570, %v2568
    %v2671 = vpack.c.b16 %v2573, %v2571
    %v2672 = vpack.c.b16 %v2574, %v2572
    %v2673 = vpack.c.b16 %v2577, %v2575
    %v2674 = vpack.c.b16 %v2578, %v2576
    %2771 = vmatprep.subr.bf16.mxu0 %v2580
    %2772 = vmatpush1.bf16.msra.mxu0 %v2579
    %2773 = vmatprep.subr.bf16.mxu0 %v2582
    %2774 = vmatpush1.bf16.msra.mxu0 %v2581
    %2775 = vmatprep.subr.bf16.mxu0 %v2584
    %2776 = vmatpush1.bf16.msra.mxu0 %v2583
    %2777 = vmatprep.subr.bf16.mxu0 %v2586
    %2778 = vmatpush1.bf16.msra.mxu0 %v2585
    %2779 = vmatprep.subr.bf16.mxu0 %v2588
    %2780 = vmatpush1.bf16.msra.mxu0 %v2587
    %2781 = vmatprep.subr.bf16.mxu0 %v2590
    %2782 = vmatpush1.bf16.msra.mxu0 %v2589
    %2783 = vmatprep.subr.bf16.mxu0 %v2592
    %2784 = vmatpush1.bf16.msra.mxu0 %v2591
    %2785 = vmatprep.subr.bf16.mxu0 %v2594
    %2786 = vmatpush1.bf16.msra.mxu0 %v2593
    %2787 = vmatprep.subr.bf16.mxu0 %v2596
    %2788 = vmatpush1.bf16.msra.mxu0 %v2595
    %2789 = vmatprep.subr.bf16.mxu0 %v2598
    %2790 = vmatpush1.bf16.msra.mxu0 %v2597
    %2791 = vmatprep.subr.bf16.mxu0 %v2600
    %2792 = vmatpush1.bf16.msra.mxu0 %v2599
    %2793 = vmatprep.subr.bf16.mxu0 %v2602
    %2794 = vmatpush1.bf16.msra.mxu0 %v2601
    %2795 = vmatprep.subr.bf16.mxu0 %v2604
    %2796 = vmatpush1.bf16.msra.mxu0 %v2603
    %2797 = vmatprep.subr.bf16.mxu0 %v2606
    %2798 = vmatpush1.bf16.msra.mxu0 %v2605
    %2799 = vmatprep.subr.bf16.mxu0 %v2608
    %2800 = vmatpush1.bf16.msra.mxu0 %v2607
    %2801 = vmatprep.subr.bf16.mxu0 %v2610
    %2802 = vmatpush1.bf16.msra.mxu0 %v2609
    %2803 = vmatprep.mubr.bf16.mxu0 %v200
    %2804 = vmatmul.mubr.bf16.gmra.mrb[0].mxu0 %v199
    %v2805 = vpop.f32.mrb[0].mxu0
    %v2806 = vadd.f32 %v2284, %v2805
    %v2807 = vpop.f32.mrb[0].mxu0
    %v2808 = vadd.f32 %v2288, %v2807
    %v2809 = vpop.f32.mrb[0].mxu0
    %v2810 = vadd.f32 %v2284, %v2809
    %v2811 = vpop.f32.mrb[0].mxu0
    %v2812 = vadd.f32 %v2288, %v2811
    %2813 = vmatprep.mubr.bf16.mxu0 %v206
    %2814 = vmatmul.mubr.bf16.gmra.mrb[0].mxu0 %v205
    %v2815 = vpop.f32.mrb[0].mxu0
    %v2816 = vadd.f32 %v2284, %v2815
    %v2817 = vpop.f32.mrb[0].mxu0
    %v2818 = vadd.f32 %v2288, %v2817
    %v2819 = vpop.f32.mrb[0].mxu0
    %v2820 = vadd.f32 %v2284, %v2819
    %v2821 = vpop.f32.mrb[0].mxu0
    %v2822 = vadd.f32 %v2288, %v2821
    %2823 = vdwg.mxu0
    %2824 = vmatprep.subr.bf16.mxu0 %v2612
    %2825 = vmatpush1.bf16.msra.mxu0 %v2611
    %2826 = vmatprep.subr.bf16.mxu0 %v2614
    %2827 = vmatpush1.bf16.msra.mxu0 %v2613
    %2828 = vmatprep.subr.bf16.mxu0 %v2616
    %2829 = vmatpush1.bf16.msra.mxu0 %v2615
    %2830 = vmatprep.subr.bf16.mxu0 %v2618
    %2831 = vmatpush1.bf16.msra.mxu0 %v2617
    %2832 = vmatprep.subr.bf16.mxu0 %v2620
    %2833 = vmatpush1.bf16.msra.mxu0 %v2619
    %2834 = vmatprep.subr.bf16.mxu0 %v2622
    %2835 = vmatpush1.bf16.msra.mxu0 %v2621
    %2836 = vmatprep.subr.bf16.mxu0 %v2624
    %2837 = vmatpush1.bf16.msra.mxu0 %v2623
    %2838 = vmatprep.subr.bf16.mxu0 %v2626
    %2839 = vmatpush1.bf16.msra.mxu0 %v2625
    %2840 = vmatprep.subr.bf16.mxu0 %v2628
    %2841 = vmatpush1.bf16.msra.mxu0 %v2627
    %2842 = vmatprep.subr.bf16.mxu0 %v2630
    %2843 = vmatpush1.bf16.msra.mxu0 %v2629
    %2844 = vmatprep.subr.bf16.mxu0 %v2632
    %2845 = vmatpush1.bf16.msra.mxu0 %v2631
    %2846 = vmatprep.subr.bf16.mxu0 %v2634
    %2847 = vmatpush1.bf16.msra.mxu0 %v2633
    %2848 = vmatprep.subr.bf16.mxu0 %v2636
    %2849 = vmatpush1.bf16.msra.mxu0 %v2635
    %2850 = vmatprep.subr.bf16.mxu0 %v2638
    %2851 = vmatpush1.bf16.msra.mxu0 %v2637
    %2852 = vmatprep.subr.bf16.mxu0 %v2640
    %2853 = vmatpush1.bf16.msra.mxu0 %v2639
    %2854 = vmatprep.subr.bf16.mxu0 %v2642
    %2855 = vmatpush1.bf16.msra.mxu0 %v2641
    %2856 = vmatprep.mubr.bf16.mxu0 %v202
    %2857 = vmatmul.mubr.bf16.gmra.mrb[0].mxu0 %v201
    %v2858 = vpop.f32.mrb[0].mxu0
    %v2859 = vadd.f32 %v2806, %v2858
    %v2860 = vpop.f32.mrb[0].mxu0
    %v2861 = vadd.f32 %v2808, %v2860
    %v2862 = vpop.f32.mrb[0].mxu0
    %v2863 = vadd.f32 %v2810, %v2862
    %v2864 = vpop.f32.mrb[0].mxu0
    %v2865 = vadd.f32 %v2812, %v2864
    %2866 = vmatprep.mubr.bf16.mxu0 %v208
    %2867 = vmatmul.mubr.bf16.gmra.mrb[0].mxu0 %v207
    %v2868 = vpop.f32.mrb[0].mxu0
    %v2869 = vadd.f32 %v2816, %v2868
    %v2870 = vpop.f32.mrb[0].mxu0
    %v2871 = vadd.f32 %v2818, %v2870
    %v2872 = vpop.f32.mrb[0].mxu0
    %v2873 = vadd.f32 %v2820, %v2872
    %v2874 = vpop.f32.mrb[0].mxu0
    %v2875 = vadd.f32 %v2822, %v2874
    %2876 = vdwg.mxu0
    %2877 = vmatprep.subr.bf16.mxu0 %v2644
    %2878 = vmatpush1.bf16.msra.mxu0 %v2643
    %2879 = vmatprep.subr.bf16.mxu0 %v2646
    %2880 = vmatpush1.bf16.msra.mxu0 %v2645
    %2881 = vmatprep.subr.bf16.mxu0 %v2648
    %2882 = vmatpush1.bf16.msra.mxu0 %v2647
    %2883 = vmatprep.subr.bf16.mxu0 %v2650
    %2884 = vmatpush1.bf16.msra.mxu0 %v2649
    %2885 = vmatprep.subr.bf16.mxu0 %v2652
    %2886 = vmatpush1.bf16.msra.mxu0 %v2651
    %2887 = vmatprep.subr.bf16.mxu0 %v2654
    %2888 = vmatpush1.bf16.msra.mxu0 %v2653
    %2889 = vmatprep.subr.bf16.mxu0 %v2656
    %2890 = vmatpush1.bf16.msra.mxu0 %v2655
    %2891 = vmatprep.subr.bf16.mxu0 %v2658
    %2892 = vmatpush1.bf16.msra.mxu0 %v2657
    %2893 = vmatprep.subr.bf16.mxu0 %v2660
    %2894 = vmatpush1.bf16.msra.mxu0 %v2659
    %2895 = vmatprep.subr.bf16.mxu0 %v2662
    %2896 = vmatpush1.bf16.msra.mxu0 %v2661
    %2897 = vmatprep.subr.bf16.mxu0 %v2664
    %2898 = vmatpush1.bf16.msra.mxu0 %v2663
    %2899 = vmatprep.subr.bf16.mxu0 %v2666
    %2900 = vmatpush1.bf16.msra.mxu0 %v2665
    %2901 = vmatprep.subr.bf16.mxu0 %v2668
    %2902 = vmatpush1.bf16.msra.mxu0 %v2667
    %2903 = vmatprep.subr.bf16.mxu0 %v2670
    %2904 = vmatpush1.bf16.msra.mxu0 %v2669
    %2905 = vmatprep.subr.bf16.mxu0 %v2672
    %2906 = vmatpush1.bf16.msra.mxu0 %v2671
    %2907 = vmatprep.subr.bf16.mxu0 %v2674
    %2908 = vmatpush1.bf16.msra.mxu0 %v2673
    %2909 = vmatprep.mubr.bf16.mxu0 %v204
    %2910 = vmatmul.mubr.bf16.gmra.mrb[0].mxu0 %v203
    %v2911 = vpop.f32.mrb[0].mxu0
    %v2912 = vadd.f32 %v2859, %v2911
    %v2913 = vpop.f32.mrb[0].mxu0
    %v2914 = vadd.f32 %v2861, %v2913
    %v2915 = vpop.f32.mrb[0].mxu0
    %v2916 = vadd.f32 %v2863, %v2915
    %v2917 = vpop.f32.mrb[0].mxu0
    %v2918 = vadd.f32 %v2865, %v2917
    %2919 = vmatprep.mubr.bf16.mxu0 %v210
    %2920 = vmatmul.mubr.bf16.gmra.mrb[0].mxu0 %v209
    %v2921 = vpop.f32.mrb[0].mxu0
    %v2922 = vadd.f32 %v2869, %v2921
    %v2923 = vpop.f32.mrb[0].mxu0
    %v2924 = vadd.f32 %v2871, %v2923
    %v2925 = vpop.f32.mrb[0].mxu0
    %v2926 = vadd.f32 %v2873, %v2925
    %v2927 = vpop.f32.mrb[0].mxu0
    %v2928 = vadd.f32 %v2875, %v2927
    %2929 = vdwg.mxu0
    %v2930 = vmul.f32 %v2165, %v2165
    %v2931 = vmul.f32 %v2167, %v2167
    %v2932 = vmul.f32 %v2169, %v2169
    %v2933 = vmul.f32 %v2171, %v2171
    %v2934 = vmul.f32 %v2175, %v2175
    %v2935 = vmul.f32 %v2177, %v2177
    %v2936 = vmul.f32 %v2179, %v2179
    %v2937 = vmul.f32 %v2181, %v2181
    %v2938 = vadd.f32 %v2930, %v2931
    %2939 = vadd.xlane.f32.xlu0 %v2938
    %v2940 = vpop.xlane.xlu0 %2939
    %v2941 = vadd.f32 %v2932, %v2933
    %2942 = vadd.xlane.f32.xlu0 %v2941
    %v2943 = vpop.xlane.xlu0 %2942
    %v2944 = vadd.f32 %v2934, %v2935
    %2945 = vadd.xlane.f32.xlu0 %v2944
    %v2946 = vpop.xlane.xlu0 %2945
    %v2947 = vadd.f32 %v2936, %v2937
    %2948 = vadd.xlane.f32.xlu0 %v2947
    %v2949 = vpop.xlane.xlu0 %2948
    %v2950 = vmax.f32 %v2940, 1e-24
    %v2951 = vmax.f32 %v2943, 1e-24
    %v2952 = vmax.f32 %v2946, 1e-24
    %v2953 = vmax.f32 %v2949, 1e-24
    %v2954 = vrsqrt.pop %v2950
    %v2955 = vrsqrt.pop %v2951
    %v2956 = vrsqrt.pop %v2952
    %v2957 = vrsqrt.pop %v2953
    %v2958 = vmul.f32 %v2165, %v2954
    %v2959 = vmul.f32 %v2167, %v2954
    %v2960 = vmul.f32 %v2169, %v2955
    %v2961 = vmul.f32 %v2171, %v2955
    %v2962 = vmul.f32 %v2175, %v2956
    %v2963 = vmul.f32 %v2177, %v2956
    %v2964 = vmul.f32 %v2179, %v2957
    %v2965 = vmul.f32 %v2181, %v2957
    %v2966 = vmul.f32 %v2912, %v2912
    %v2967 = vmul.f32 %v2914, %v2914
    %v2968 = vmul.f32 %v2916, %v2916
    %v2969 = vmul.f32 %v2918, %v2918
    %v2970 = vmul.f32 %v2922, %v2922
    %v2971 = vmul.f32 %v2924, %v2924
    %v2972 = vmul.f32 %v2926, %v2926
    %v2973 = vmul.f32 %v2928, %v2928
    %v2974 = vadd.f32 %v2966, %v2967
    %2975 = vadd.xlane.f32.xlu0 %v2974
    %v2976 = vpop.xlane.xlu0 %2975
    %v2977 = vadd.f32 %v2968, %v2969
    %2978 = vadd.xlane.f32.xlu0 %v2977
    %v2979 = vpop.xlane.xlu0 %2978
    %v2980 = vadd.f32 %v2970, %v2971
    %2981 = vadd.xlane.f32.xlu0 %v2980
    %v2982 = vpop.xlane.xlu0 %2981
    %v2983 = vadd.f32 %v2972, %v2973
    %2984 = vadd.xlane.f32.xlu0 %v2983
    %v2985 = vpop.xlane.xlu0 %2984
    %v2986 = vmax.f32 %v2976, 1e-24
    %v2987 = vmax.f32 %v2979, 1e-24
    %v2988 = vmax.f32 %v2982, 1e-24
    %v2989 = vmax.f32 %v2985, 1e-24
    %v2990 = vrsqrt.pop %v2986
    %v2991 = vrsqrt.pop %v2987
    %v2992 = vrsqrt.pop %v2988
    %v2993 = vrsqrt.pop %v2989
    %v2994 = vmul.f32 %v2912, %v2990
    %v2995 = vmul.f32 %v2914, %v2990
    %v2996 = vmul.f32 %v2916, %v2991
    %v2997 = vmul.f32 %v2918, %v2991
    %v2998 = vmul.f32 %v2922, %v2992
    %v2999 = vmul.f32 %v2924, %v2992
    %v3000 = vmul.f32 %v2926, %v2993
    %v3001 = vmul.f32 %v2928, %v2993
    %3002 = vmatprep.subr.mxu0 %v2995
    %3003 = vmatpush1.xpose.msra.mxu0 %v2994
    %3004 = vmatprep.subr.mxu0 %v2997
    %3005 = vmatpush1.xpose.msra.mxu0 %v2996
    %3006 = vmatprep.subr.mxu0 %v2999
    %3007 = vmatpush1.xpose.msra.mxu0 %v2998
    %3008 = vmatprep.subr.mxu0 %v3001
    %3009 = vmatpush1.xpose.msra.mxu0 %v3000
    %3010 = vmatprep.subr.mxu0 0.0
    %3011 = vmatpush1.xpose.msra.mxu0 0.0
    %3012 = vmatprep.subr.mxu0 0.0
    %3013 = vmatpush1.xpose.msra.mxu0 0.0
    %3014 = vmatprep.subr.mxu0 0.0
    %3015 = vmatpush1.xpose.msra.mxu0 0.0
    %3016 = vmatprep.subr.mxu0 0.0
    %3017 = vmatpush1.xpose.msra.mxu0 0.0
    %3018 = vmatprep.subr.mxu0 0.0
    %3019 = vmatpush1.xpose.msra.mxu0 0.0
    %3020 = vmatprep.subr.mxu0 0.0
    %3021 = vmatpush1.xpose.msra.mxu0 0.0
    %3022 = vmatprep.subr.mxu0 0.0
    %3023 = vmatpush1.xpose.msra.mxu0 0.0
    %3024 = vmatprep.subr.mxu0 0.0
    %3025 = vmatpush1.xpose.msra.mxu0 0.0
    %3026 = vmatprep.subr.mxu0 0.0
    %3027 = vmatpush1.xpose.msra.mxu0 0.0
    %3028 = vmatprep.subr.mxu0 0.0
    %3029 = vmatpush1.xpose.msra.mxu0 0.0
    %3030 = vmatprep.subr.mxu0 0.0
    %3031 = vmatpush1.xpose.msra.mxu0 0.0
    %3032 = vmatprep.subr.mxu0 0.0
    %3033 = vmatpush1.xpose.msra.mxu0 0.0
    %3034 = vmatprep.subr.mxu0 0.0
    %3035 = vmatpush1.xpose.msra.mxu0 0.0
    %3036 = vmatprep.subr.mxu0 0.0
    %3037 = vmatpush1.xpose.msra.mxu0 0.0
    %3038 = vmatprep.subr.mxu0 0.0
    %3039 = vmatpush1.xpose.msra.mxu0 0.0
    %3040 = vmatprep.subr.mxu0 0.0
    %3041 = vmatpush1.xpose.msra.mxu0 0.0
    %3042 = vmatprep.subr.mxu0 0.0
    %3043 = vmatpush1.xpose.msra.mxu0 0.0
    %3044 = vmatprep.subr.mxu0 0.0
    %3045 = vmatpush1.xpose.msra.mxu0 0.0
    %3046 = vmatprep.subr.mxu0 0.0
    %3047 = vmatpush1.xpose.msra.mxu0 0.0
    %3048 = vmatprep.subr.mxu0 0.0
    %3049 = vmatpush1.xpose.msra.mxu0 0.0
    %3050 = vmatprep.subr.mxu0 0.0
    %3051 = vmatpush1.xpose.msra.mxu0 0.0
    %3052 = vmatprep.subr.mxu0 0.0
    %3053 = vmatpush1.xpose.msra.mxu0 0.0
    %3054 = vmatprep.subr.mxu0 0.0
    %3055 = vmatpush1.xpose.msra.mxu0 0.0
    %3056 = vmatprep.subr.mxu0 0.0
    %3057 = vmatpush1.xpose.msra.mxu0 0.0
    %3058 = vmatprep.subr.mxu0 0.0
    %3059 = vmatpush1.xpose.msra.mxu0 0.0
    %3060 = vmatprep.subr.mxu0 0.0
    %3061 = vmatpush1.xpose.msra.mxu0 0.0
    %3062 = vmatprep.subr.mxu0 0.0
    %3063 = vmatpush1.xpose.msra.mxu0 0.0
    %3064 = vmatprep.subr.mxu0 0.0
    %3065 = vmatpush1.xpose.msra.mxu0 0.0
    %3066 = vmatprep.mubr.f32.mxu0 %v2959
    %3067 = vmatmul.mubr.f32.gmra.mrb[0].mxu0 %v2958
    %v3068 = vpop.f32.mrb[0].mxu0
    %v3069 = vadd.f32 0.0, %v3068
    %v3070 = vpop.f32.mrb[0].mxu0
    %3071 = vmatprep.mubr.f32.mxu0 %v2961
    %3072 = vmatmul.mubr.f32.gmra.mrb[0].mxu0 %v2960
    %v3073 = vpop.f32.mrb[0].mxu0
    %v3074 = vadd.f32 0.0, %v3073
    %v3075 = vpop.f32.mrb[0].mxu0
    %3076 = vmatprep.mubr.f32.mxu0 %v2963
    %3077 = vmatmul.mubr.f32.gmra.mrb[0].mxu0 %v2962
    %v3078 = vpop.f32.mrb[0].mxu0
    %v3079 = vadd.f32 0.0, %v3078
    %v3080 = vpop.f32.mrb[0].mxu0
    %3081 = vmatprep.mubr.f32.mxu0 %v2965
    %3082 = vmatmul.mubr.f32.gmra.mrb[0].mxu0 %v2964
    %v3083 = vpop.f32.mrb[0].mxu0
    %v3084 = vadd.f32 0.0, %v3083
    %v3085 = vpop.f32.mrb[0].mxu0
    %3086 = vdwg.mxu0
    %v3087 = vmul.f32 %v3069, 2.0
    %v3088 = vmul.f32 %v3074, 2.0
    %v3089 = vmul.f32 %v3079, 2.0
    %v3090 = vmul.f32 %v3084, 2.0
    %v3091 = vlaneseq
    %v3092 = vshrl.u32 %v3091, 7
    %v3093 = vadd.s32 %v3092, 8
    %v3094 = vadd.s32 %v3092, 16
    %v3095 = vadd.s32 %v3092, 24
    %v3096 = vlaneseq
    %v3097 = vand.u32 %v3096, 127
    %vm3098 = vcmp.eq.s32.totalorder %v3092, %v3097
    %vm3099 = vcmp.eq.s32.totalorder %v3093, %v3097
    %vm3100 = vcmp.eq.s32.totalorder %v3094, %v3097
    %vm3101 = vcmp.eq.s32.totalorder %v3095, %v3097
    %v3102 = vsel %vm3098, 1, 0
    %v3103 = vsel %vm3099, 1, 0
    %v3104 = vsel %vm3100, 1, 0
    %v3105 = vsel %vm3101, 1, 0
    %v3106 = vcvt.s32.f32 %v3102
    %v3107 = vcvt.s32.f32 %v3103
    %v3108 = vcvt.s32.f32 %v3104
    %v3109 = vcvt.s32.f32 %v3105
    %v3110 = vmul.f32 %v3087, %v3106
    %v3111 = vmul.f32 %v3088, %v3107
    %v3112 = vmul.f32 %v3089, %v3108
    %v3113 = vmul.f32 %v3090, %v3109
    %vm3114 = vcmask 261120
    %v3115 = vsel %vm3114, %v3110, 0.0
    %v3116 = vsel %vm3114, %v3111, 0.0
    %v3117 = vadd.f32 %v3115, %v3116
    %v3118 = vsel %vm3114, %v3112, 0.0
    %v3119 = vadd.f32 %v3117, %v3118
    %v3120 = vsel %vm3114, %v3113, 0.0
    %v3121 = vadd.f32 %v3119, %v3120
    %3122 = vadd.xlane.f32.xlu0 %v3121
    %v3123 = vpop.xlane.xlu0 %3122
    %v3124 = vrot.slane %v3123, 4
    %v3125 = vadd.f32 %v3123, %v3124
    %v3126 = vrot.slane %v3125, 2
    %v3127 = vadd.f32 %v3125, %v3126
    %v3128 = vrot.slane %v3127, 1
    %v3129 = vadd.f32 %v3127, %v3128
    %s3130 = vtos %v3129
    %s3131 = smul.f32 %s3130, 0.03125
    %v3132 = vsel %vm3114, %v3087, -inf
    %3133 = vmax.xlane.f32.xlu0 %v3132
    %v3134 = vpop.xlane.xlu0 %3133
    %v3135 = vsel %vm3114, %v3088, -inf
    %3136 = vmax.xlane.f32.xlu0 %v3135
    %v3137 = vpop.xlane.xlu0 %3136
    %v3138 = vsel %vm3114, %v3089, -inf
    %3139 = vmax.xlane.f32.xlu0 %v3138
    %v3140 = vpop.xlane.xlu0 %3139
    %v3141 = vsel %vm3114, %v3090, -inf
    %3142 = vmax.xlane.f32.xlu0 %v3141
    %v3143 = vpop.xlane.xlu0 %3142
    %v3144 = vsub.f32 %v3087, %v3134
    %v3145 = vsub.f32 %v3088, %v3137
    %v3146 = vsub.f32 %v3089, %v3140
    %v3147 = vsub.f32 %v3090, %v3143
    %v3148 = vmul.f32 %v3144, 1.442695
    %v3149 = vpow.pop %v3148
    %v3150 = vmul.f32 %v3145, 1.442695
    %v3151 = vpow.pop %v3150
    %v3152 = vmul.f32 %v3146, 1.442695
    %v3153 = vpow.pop %v3152
    %v3154 = vmul.f32 %v3147, 1.442695
    %v3155 = vpow.pop %v3154
    %v3156 = vsel %vm3114, %v3149, 0.0
    %3157 = vadd.xlane.f32.xlu0 %v3156
    %v3158 = vpop.xlane.xlu0 %3157
    %v3159 = vsel %vm3114, %v3151, 0.0
    %3160 = vadd.xlane.f32.xlu0 %v3159
    %v3161 = vpop.xlane.xlu0 %3160
    %v3162 = vsel %vm3114, %v3153, 0.0
    %3163 = vadd.xlane.f32.xlu0 %v3162
    %v3164 = vpop.xlane.xlu0 %3163
    %v3165 = vsel %vm3114, %v3155, 0.0
    %3166 = vadd.xlane.f32.xlu0 %v3165
    %v3167 = vpop.xlane.xlu0 %3166
    %v3168 = vlog2.pop %v3158
    %v3169 = vmul.f32 %v3168, 0.6931472
    %v3170 = vlog2.pop %v3161
    %v3171 = vmul.f32 %v3170, 0.6931472
    %v3172 = vlog2.pop %v3164
    %v3173 = vmul.f32 %v3172, 0.6931472
    %v3174 = vlog2.pop %v3167
    %v3175 = vmul.f32 %v3174, 0.6931472
    %v3176 = vadd.f32 %v3134, %v3169
    %v3177 = vadd.f32 %v3137, %v3171
    %v3178 = vadd.f32 %v3140, %v3173
    %v3179 = vadd.f32 %v3143, %v3175
    %v3180 = vmax.f32 %v3132, %v3135
    %v3181 = vmax.f32 %v3138, %v3141
    %v3182 = vmax.f32 %v3180, %v3181
    %v3183 = vrot.slane %v3182, 4
    %v3184 = vmax.f32 %v3182, %v3183
    %v3185 = vrot.slane %v3184, 2
    %v3186 = vmax.f32 %v3184, %v3185
    %v3187 = vrot.slane %v3186, 1
    %v3188 = vmax.f32 %v3186, %v3187
    %v3189 = vsub.f32 %v3087, %v3188
    %v3190 = vsub.f32 %v3088, %v3188
    %v3191 = vsub.f32 %v3089, %v3188
    %v3192 = vsub.f32 %v3090, %v3188
    %v3193 = vmul.f32 %v3189, 1.442695
    %v3194 = vpow.pop %v3193
    %v3195 = vmul.f32 %v3190, 1.442695
    %v3196 = vpow.pop %v3195
    %v3197 = vmul.f32 %v3191, 1.442695
    %v3198 = vpow.pop %v3197
    %v3199 = vmul.f32 %v3192, 1.442695
    %v3200 = vpow.pop %v3199
    %v3201 = vsel %vm3114, %v3194, 0.0
    %v3202 = vsel %vm3114, %v3196, 0.0
    %v3203 = vadd.f32 %v3201, %v3202
    %v3204 = vsel %vm3114, %v3198, 0.0
    %v3205 = vadd.f32 %v3203, %v3204
    %v3206 = vsel %vm3114, %v3200, 0.0
    %v3207 = vadd.f32 %v3205, %v3206
    %v3208 = vrot.slane %v3207, 4
    %v3209 = vadd.f32 %v3207, %v3208
    %v3210 = vrot.slane %v3209, 2
    %v3211 = vadd.f32 %v3209, %v3210
    %v3212 = vrot.slane %v3211, 1
    %v3213 = vadd.f32 %v3211, %v3212
    %v3214 = vlog2.pop %v3213
    %v3215 = vmul.f32 %v3214, 0.6931472
    %v3216 = vadd.f32 %v3188, %v3215
    %vm3217 = vcmask 7168
    %v3218 = vsel %vm3217, %v3176, 0.0
    %v3219 = vsel %vm3217, %v3177, 0.0
    %v3220 = vadd.f32 %v3218, %v3219
    %v3221 = vsel %vm3217, %v3178, 0.0
    %v3222 = vadd.f32 %v3220, %v3221
    %v3223 = vsel %vm3217, %v3179, 0.0
    %v3224 = vadd.f32 %v3222, %v3223
    %3225 = vadd.xlane.f32.xlu0 %v3224
    %v3226 = vpop.xlane.xlu0 %3225
    %v3227 = vrot.slane %v3226, 4
    %v3228 = vadd.f32 %v3226, %v3227
    %v3229 = vrot.slane %v3228, 2
    %v3230 = vadd.f32 %v3228, %v3229
    %v3231 = vrot.slane %v3230, 1
    %v3232 = vadd.f32 %v3230, %v3231
    %s3233 = vtos %v3232
    %v3234 = vrcp.pop 32.0
    %s3235 = vtos %v3234
    %s3236 = smul.f32 %s3233, %s3235
    %vm3237 = vcmask 253952
    %v3238 = vsel %vm3237, %v3216, 0.0
    %3239 = vadd.xlane.f32.xlu0 %v3238
    %v3240 = vpop.xlane.xlu0 %3239
    %v3241 = vrot.slane %v3240, 4
    %v3242 = vadd.f32 %v3240, %v3241
    %v3243 = vrot.slane %v3242, 2
    %v3244 = vadd.f32 %v3242, %v3243
    %v3245 = vrot.slane %v3244, 1
    %v3246 = vadd.f32 %v3244, %v3245
    %s3247 = vtos %v3246
    %v3248 = vrcp.pop 32.0
    %s3249 = vtos %v3248
    %s3250 = smul.f32 %s3247, %s3249
    %s3251 = sadd.f32 %s3236, %s3250
    %s3252 = smul.f32 %s3251, 0.5
    %s3253 = ssub.f32 %s3252, %s3131
    %s3254 = scalar_lea.smem [#allocation10], 0
    %3255 = sst [smem:[%s3254]] %s3253
    // Predicated region
    $region42: #{tpu_custom_call.1} parent=1 // pred_check
      _
    $region43: #{tpu_custom_call.1} parent=1 // pred_check_branch
      %3257 = sbr.rel (0) target = $region45
    $region44: #{tpu_custom_call.1} parent=1 // pred_region
      %s3259 = ssub.s32 16, 16
      %3260 = vsyncadd [#allocation4], %s3259
      %3263 = dma.smem_to_hbm [#allocation10], 16, %s6, [#allocation4]
    $region45: #{tpu_custom_call.1} parent=1 // pred_fallthru
      _
    // Predicated region
    $region46: #{tpu_custom_call.1} parent=1 // pred_check
      _
    $region47: #{tpu_custom_call.1} parent=1 // pred_check_branch
      %3265 = sbr.rel (0) target = $region49
    $region48: #{tpu_custom_call.1} parent=1 // pred_region
      %3266 = dma.done [#allocation4], 16
    $region49: #{tpu_custom_call.1} parent=1 // pred_fallthru
      _
    %3267 = sfence
    %3268 = vsyncpa [#allocation3], 1
    %3269 = vsyncpa [#allocation6], 1
    %3270 = vsyncpa [#allocation9], 1
    %3271 = vsyncpa [#allocation4], 1

</llo_original>
